<compile_context>
chip_gen: v7x
topology: tpu7x:2x2x1
jax: 0.10.0
libtpu: 0.0.40
codegen_flags: <defaults>
</compile_context>

<pallas_src>
import jax
import jax.numpy as jnp
from jax import lax
from jax.experimental import pallas as pl
from jax.experimental.pallas import tpu as pltpu


_LANE = 128


# ---------------------------------------------------------------------------
# helpers
# ---------------------------------------------------------------------------
def _round_up(x, m):
    return (x + m - 1) // m * m


def _vmem_capacity_bytes():
    """Generation-aware VMEM capacity (128 MiB v5e/v6e, 64 MiB/core v7x)."""
    try:
        return int(pltpu.get_tpu_info().vmem_capacity_bytes)
    except Exception:
        return 64 << 20  # conservative default (v7x per-core VMEM)


def _choose_tb(batch, vmem_cap):
    """Batch tile: fill the MXU M dim; never split a small batch into tiny tiles."""
    max_tb = 512 if vmem_cap >= (96 << 20) else 256   # bigger tiles on v5e/v6e
    for t in (max_tb, 256, 128):
        if t <= max_tb and batch >= t and batch % t == 0:
            return t
    return batch   # small batch -> one full tile (keeps rows >= 16 for bf16 packing)


# ---------------------------------------------------------------------------
# fused forward kernel
# grid = (batch tiles ["parallel"], residual blocks ["arbitrary"])
# acc_ref: (tb, H) f32 activation, resident across the block axis
# ---------------------------------------------------------------------------
def _fused_kernel(x_ref, win_ref, bin_ref,
                  gamma_ref, beta_ref, w1_ref, b1_ref, w2_ref, b2_ref,
                  wout_ref, bout_ref, o_ref, acc_ref):
    j = pl.program_id(1)

    @pl.when(j == 0)
    def _():
        # input projection: out = x @ W_in + b_in   (f32 accumulator)
        x = x_ref[...].astype(jnp.bfloat16)
        acc_ref[...] = jnp.dot(x, win_ref[...],
                               preferred_element_type=jnp.float32) + bin_ref[...]

    # --- residual block j: out += Dense2( relu( Dense1( LayerNorm(out) ) ) ) ---
    out = acc_ref[...]
    mean = jnp.mean(out, axis=-1, keepdims=True)
    cen = out - mean
    var = jnp.mean(cen * cen, axis=-1, keepdims=True)           # biased, eps=1e-5
    xn = cen * lax.rsqrt(var + 1e-5) * gamma_ref[0] + beta_ref[0]

    h = jnp.dot(xn.astype(jnp.bfloat16), w1_ref[0],
                preferred_element_type=jnp.float32) + b1_ref[0]
    h = jnp.maximum(h, 0.0)
    acc_ref[...] = out + jnp.dot(h.astype(jnp.bfloat16), w2_ref[0],
                                 preferred_element_type=jnp.float32) + b2_ref[0]

    @pl.when(j == pl.num_programs(1) - 1)
    def _():
        # final ac_fn (relu) + output projection, lane-dense padded N
        final = jnp.maximum(acc_ref[...], 0.0).astype(jnp.bfloat16)
        o_ref[...] = (jnp.dot(final, wout_ref[...],
                              preferred_element_type=jnp.float32)
                      + bout_ref[...]).astype(o_ref.dtype)


def mlp_resnet_forward(x, params):
    """Full MLPResNet forward in a single fused pallas_call."""
    B, input_dim = x.shape
    win, bin_ = params["dense1_w"], params["dense1_b"]
    wout, bout = params["dense2_w"], params["dense2_b"]
    blocks = params["blocks"]
    num_blocks = len(blocks)
    assert num_blocks >= 1, "fused kernel expects at least one residual block"

    H = win.shape[1]
    H4 = blocks[0]["w1"].shape[1]
    Nout = wout.shape[1]
    Npad = max(_LANE, _round_up(Nout, _LANE))        # lane-dense output stores

    vmem_cap = _vmem_capacity_bytes()
    tb = _choose_tb(B, vmem_cap)
    assert B % tb == 0
    n_tiles = B // tb

    # --- pack parameters (block axis leads the stacked block params) ---
    win_bf = win.astype(jnp.bfloat16)
    bin2 = bin_.reshape(1, H).astype(jnp.float32)
    wout_p = jnp.zeros((H, Npad), jnp.bfloat16).at[:, :Nout].set(
        wout.astype(jnp.bfloat16))
    bout_p = jnp.zeros((1, Npad), jnp.float32).at[:, :Nout].set(
        bout.astype(jnp.float32))

    w1_s = jnp.stack([b["w1"] for b in blocks]).astype(jnp.bfloat16)        # (nb,H,4H)
    w2_s = jnp.stack([b["w2"] for b in blocks]).astype(jnp.bfloat16)        # (nb,4H,H)
    b1_s = jnp.stack([b["b1"].reshape(1, H4) for b in blocks]).astype(jnp.float32)
    b2_s = jnp.stack([b["b2"].reshape(1, H) for b in blocks]).astype(jnp.float32)
    g_s = jnp.stack([b["gamma"].reshape(1, H) for b in blocks]).astype(jnp.float32)
    be_s = jnp.stack([b["beta"].reshape(1, H) for b in blocks]).astype(jnp.float32)

    # --- VMEM budget & cost estimate ---
    resident = (2 * tb * input_dim * 4            # x tile (double-buffered)
                + 2 * tb * Npad * 4               # out tile (double-buffered)
                + input_dim * H * 2 + H * 4       # dense1 (resident, bf16)
                + H * Npad * 2 + Npad * 4         # dense2 (resident, bf16)
                + 2 * 2 * H * H4 * 2              # block W1+W2 (bf16, double-buffered)
                + 2 * (H4 + 3 * H) * 4            # block biases + LN params
                + tb * H * 4                      # acc scratch
                + tb * H4 * 4)                    # live hidden intermediate
    vmem_limit = int(min(max(resident + (8 << 20), 32 << 20),
                         vmem_cap - (8 << 20)))

    cost = pl.CostEstimate(
        flops=(2 * B * input_dim * H
               + num_blocks * 4 * B * H * H4
               + 2 * B * H * Npad),
        transcendentals=B * num_blocks,
        bytes_accessed=(B * input_dim * 4 + B * Npad * 4
                        + input_dim * H * 2 + H * 4 + H * Npad * 2 + Npad * 4
                        # block weights re-streamed once per batch tile
                        + n_tiles * num_blocks * (2 * H * H4 * 2 + (H4 + 3 * H) * 4)))

    y = pl.pallas_call(
        _fused_kernel,
        out_shape=jax.ShapeDtypeStruct((B, Npad), x.dtype),
        grid_spec=pltpu.PrefetchScalarGridSpec(
            num_scalar_prefetch=0,
            grid=(n_tiles, num_blocks),
            in_specs=[
                pl.BlockSpec((tb, input_dim), lambda i, j: (i, 0)),    # x (resident over j)
                pl.BlockSpec((input_dim, H), lambda i, j: (0, 0)),     # W_in (resident)
                pl.BlockSpec((1, H), lambda i, j: (0, 0)),             # b_in
                pl.BlockSpec((1, 1, H), lambda i, j: (j, 0, 0)),       # gamma[j]
                pl.BlockSpec((1, 1, H), lambda i, j: (j, 0, 0)),       # beta[j]
                pl.BlockSpec((1, H, H4), lambda i, j: (j, 0, 0)),      # W1[j]
                pl.BlockSpec((1, 1, H4), lambda i, j: (j, 0, 0)),      # b1[j]
                pl.BlockSpec((1, H4, H), lambda i, j: (j, 0, 0)),      # W2[j]
                pl.BlockSpec((1, 1, H), lambda i, j: (j, 0, 0)),       # b2[j]
                pl.BlockSpec((H, Npad), lambda i, j: (0, 0)),          # W_out (resident)
                pl.BlockSpec((1, Npad), lambda i, j: (0, 0)),          # b_out
            ],
            out_specs=pl.BlockSpec((tb, Npad), lambda i, j: (i, 0)),
            scratch_shapes=[pltpu.VMEM((tb, H), jnp.float32)],         # activation
        ),
        compiler_params=pltpu.CompilerParams(
            dimension_semantics=("parallel", "arbitrary"),
            vmem_limit_bytes=vmem_limit),
        cost_estimate=cost,
    )(x, win_bf, bin2, g_s, be_s, w1_s, b1_s, w2_s, b2_s, wout_p, bout_p)

    return y[:, :Nout] if Npad != Nout else y


# ---------------------------------------------------------------------------
# pure-JAX reference (matches the PyTorch forward in eval mode)
# ---------------------------------------------------------------------------
def reference_forward(x, params):
    def layernorm(v, g, b):
        m = jnp.mean(v, axis=-1, keepdims=True)
        var = jnp.mean((v - m) ** 2, axis=-1, keepdims=True)
        return (v - m) / jnp.sqrt(var + 1e-5) * g + b

    out = x @ params["dense1_w"] + params["dense1_b"]
    for blk in params["blocks"]:
        h = layernorm(out, blk["gamma"], blk["beta"])
        h = jnp.maximum(h @ blk["w1"] + blk["b1"], 0.0)
        out = out + h @ blk["w2"] + blk["b2"]
    out = jnp.maximum(out, 0.0)
    return out @ params["dense2_w"] + params["dense2_b"]


def init_params(key, num_blocks, input_dim, hidden_dim, output_size):
    H, H4 = hidden_dim, 4 * hidden_dim
    keys = jax.random.split(key, 4 + 4 * num_blocks)

    def lin(kw, kb, fan_in, fan_out):
        s = 1.0 / jnp.sqrt(fan_in)
        w = jax.random.uniform(kw, (fan_in, fan_out), jnp.float32, -s, s)
        b = jax.random.uniform(kb, (fan_out,), jnp.float32, -s, s)
        return w, b

    d1w, d1b = lin(keys[0], keys[1], input_dim, H)
    d2w, d2b = lin(keys[2], keys[3], H, output_size)
    blocks = []
    for i in range(num_blocks):
        k = keys[4 + 4 * i: 8 + 4 * i]
        w1, b1 = lin(k[0], k[1], H, H4)
        w2, b2 = lin(k[2], k[3], H4, H)
        blocks.append(dict(gamma=jnp.ones((H,), jnp.float32),
                           beta=jnp.zeros((H,), jnp.float32),
                           w1=w1, b1=b1, w2=w2, b2=b2))
    return dict(dense1_w=d1w, dense1_b=d1b, dense2_w=d2w, dense2_b=d2b,
                blocks=blocks)


if __name__ == "__main__":
    # small demo shapes: batch=16, input_dim=64, hidden_dim=128, output_size=128,
    # num_blocks=2
    B, input_dim, hidden_dim, output_size, num_blocks = 16, 64, 128, 128, 2

    key = jax.random.PRNGKey(0)
    kx, kp = jax.random.split(key)
    x = jax.random.normal(kx, (B, input_dim), dtype=jnp.float32)
    params = init_params(kp, num_blocks, input_dim, hidden_dim, output_size)

    y = mlp_resnet_forward(x, params)
    y = jax.block_until_ready(y)

    y_ref = reference_forward(x, params)
    # bf16 MXU operands (f32 accumulation) -> slightly looser tolerance vs f32 ref
    assert y.shape == y_ref.shape
    assert jnp.allclose(y, y_ref, atol=5e-2, rtol=5e-2), "mismatch vs reference"

    print("KERNEL_OK")
</pallas_src>

<mosaic_0001>
module attributes {stable_mosaic.version = 11 : i64} {
  func.func @_fused_kernel(%arg0: i32, %arg1: i32, %arg2: memref<16x64xf32, #tpu.memory_space<vmem>>, %arg3: memref<64x128xbf16, #tpu.memory_space<vmem>>, %arg4: memref<1x128xf32, #tpu.memory_space<vmem>>, %arg5: memref<1x1x128xf32, #tpu.memory_space<vmem>>, %arg6: memref<1x1x128xf32, #tpu.memory_space<vmem>>, %arg7: memref<1x128x512xbf16, #tpu.memory_space<vmem>>, %arg8: memref<1x1x512xf32, #tpu.memory_space<vmem>>, %arg9: memref<1x512x128xbf16, #tpu.memory_space<vmem>>, %arg10: memref<1x1x128xf32, #tpu.memory_space<vmem>>, %arg11: memref<128x128xbf16, #tpu.memory_space<vmem>>, %arg12: memref<1x128xf32, #tpu.memory_space<vmem>>, %arg13: memref<16x128xf32, #tpu.memory_space<vmem>>, %arg14: memref<16x128xf32, #tpu.memory_space<vmem>>) attributes {dimension_semantics = [#tpu.dimension_semantics<parallel>, #tpu.dimension_semantics<arbitrary>], iteration_bounds = array<i64: 1, 2>, scalar_prefetch = 0 : i64, scratch_operands = 1 : i64, tpu.core_type = #tpu.core_type<tc>, window_params = [{transform_indices = @transform_0, window_bounds = array<i64: 16, 64>}, {pipeline_mode = #tpu.pipeline_mode<synchronous>, transform_indices = @transform_1, window_bounds = array<i64: 64, 128>}, {pipeline_mode = #tpu.pipeline_mode<synchronous>, transform_indices = @transform_2, window_bounds = array<i64: 1, 128>}, {transform_indices = @transform_3, window_bounds = array<i64: 1, 1, 128>}, {transform_indices = @transform_4, window_bounds = array<i64: 1, 1, 128>}, {transform_indices = @transform_5, window_bounds = array<i64: 1, 128, 512>}, {transform_indices = @transform_6, window_bounds = array<i64: 1, 1, 512>}, {transform_indices = @transform_7, window_bounds = array<i64: 1, 512, 128>}, {transform_indices = @transform_8, window_bounds = array<i64: 1, 1, 128>}, {pipeline_mode = #tpu.pipeline_mode<synchronous>, transform_indices = @transform_9, window_bounds = array<i64: 128, 128>}, {pipeline_mode = #tpu.pipeline_mode<synchronous>, transform_indices = @transform_10, window_bounds = array<i64: 1, 128>}, {transform_indices = @transform_11, window_bounds = array<i64: 16, 128>}]} {
    %c0_i32 = arith.constant 0 : i32
    %0 = arith.cmpi eq, %arg1, %c0_i32 : i32
    %1 = arith.extui %0 : i1 to i32
    %c0_i32_0 = arith.constant 0 : i32
    %2 = arith.cmpi ne, %1, %c0_i32_0 : i32
    scf.if %2 {
      %c0_30 = arith.constant 0 : index
      %c0_31 = arith.constant 0 : index
      %51 = vector.load %arg2[%c0_30, %c0_31] : memref<16x64xf32, #tpu.memory_space<vmem>>, vector<16x64xf32>
      %52 = arith.truncf %51 : vector<16x64xf32> to vector<16x64xbf16>
      %c0_32 = arith.constant 0 : index
      %c0_33 = arith.constant 0 : index
      %53 = vector.load %arg3[%c0_32, %c0_33] : memref<64x128xbf16, #tpu.memory_space<vmem>>, vector<64x128xbf16>
      %cst_34 = arith.constant dense<0.000000e+00> : vector<16x128xf32>
      %54 = tpu.matmul %52, %53, %cst_34 {dimension_numbers = #tpu.dot_dimension_numbers<[1], [0], [0], [1], [0, 0, 1, 1], [], []>} : vector<16x64xbf16>, vector<64x128xbf16>, vector<16x128xf32> -> vector<16x128xf32>
      %c0_35 = arith.constant 0 : index
      %c0_36 = arith.constant 0 : index
      %55 = vector.load %arg4[%c0_35, %c0_36] : memref<1x128xf32, #tpu.memory_space<vmem>>, vector<1x128xf32>
      %56 = vector.broadcast %55 : vector<1x128xf32> to vector<16x128xf32>
      %57 = arith.addf %54, %56 : vector<16x128xf32>
      %c0_37 = arith.constant 0 : index
      %c0_38 = arith.constant 0 : index
      %58 = vector.load %arg14[%c0_37, %c0_38] : memref<16x128xf32, #tpu.memory_space<vmem>>, vector<16x128xf32>
      tpu.vector_store %arg14[%c0_37, %c0_38], %57 {strides = array<i32>} : memref<16x128xf32, #tpu.memory_space<vmem>>, vector<16x128xf32>,
    } else {
    }
    %c0 = arith.constant 0 : index
    %c0_1 = arith.constant 0 : index
    %3 = vector.load %arg14[%c0, %c0_1] : memref<16x128xf32, #tpu.memory_space<vmem>>, vector<16x128xf32>
    %cst = arith.constant dense<0.000000e+00> : vector<16xf32>
    %4 = vector.multi_reduction <add>, %3, %cst [1] : vector<16x128xf32> to vector<16xf32>
    %5 = vector.shape_cast %4 : vector<16xf32> to vector<16x1xf32>
    %cst_2 = arith.constant 1.280000e+02 : f32
    %6 = vector.broadcast %cst_2 : f32 to vector<16x1xf32>
    %7 = arith.divf %5, %6 : vector<16x1xf32>
    %8 = vector.broadcast %7 : vector<16x1xf32> to vector<16x128xf32>
    %9 = arith.subf %3, %8 : vector<16x128xf32>
    %10 = arith.mulf %9, %9 : vector<16x128xf32>
    %cst_3 = arith.constant dense<0.000000e+00> : vector<16xf32>
    %11 = vector.multi_reduction <add>, %10, %cst_3 [1] : vector<16x128xf32> to vector<16xf32>
    %12 = vector.shape_cast %11 : vector<16xf32> to vector<16x1xf32>
    %cst_4 = arith.constant 1.280000e+02 : f32
    %13 = vector.broadcast %cst_4 : f32 to vector<16x1xf32>
    %14 = arith.divf %12, %13 : vector<16x1xf32>
    %cst_5 = arith.constant 9.99999974E-6 : f32
    %15 = vector.broadcast %cst_5 : f32 to vector<16x1xf32>
    %16 = arith.addf %14, %15 : vector<16x1xf32>
    %17 = math.rsqrt %16 : vector<16x1xf32>
    %18 = vector.broadcast %17 : vector<16x1xf32> to vector<16x128xf32>
    %19 = arith.mulf %9, %18 : vector<16x128xf32>
    %c0_6 = arith.constant 0 : index
    %c0_7 = arith.constant 0 : index
    %c0_8 = arith.constant 0 : index
    %20 = vector.load %arg5[%c0_6, %c0_7, %c0_8] : memref<1x1x128xf32, #tpu.memory_space<vmem>>, vector<1x1x128xf32>
    %21 = vector.shape_cast %20 : vector<1x1x128xf32> to vector<1x128xf32>
    %22 = vector.broadcast %21 : vector<1x128xf32> to vector<16x128xf32>
    %23 = arith.mulf %19, %22 : vector<16x128xf32>
    %c0_9 = arith.constant 0 : index
    %c0_10 = arith.constant 0 : index
    %c0_11 = arith.constant 0 : index
    %24 = vector.load %arg6[%c0_9, %c0_10, %c0_11] : memref<1x1x128xf32, #tpu.memory_space<vmem>>, vector<1x1x128xf32>
    %25 = vector.shape_cast %24 : vector<1x1x128xf32> to vector<1x128xf32>
    %26 = vector.broadcast %25 : vector<1x128xf32> to vector<16x128xf32>
    %27 = arith.addf %23, %26 : vector<16x128xf32>
    %28 = arith.truncf %27 : vector<16x128xf32> to vector<16x128xbf16>
    %c0_12 = arith.constant 0 : index
    %c0_13 = arith.constant 0 : index
    %c0_14 = arith.constant 0 : index
    %29 = vector.load %arg7[%c0_12, %c0_13, %c0_14] : memref<1x128x512xbf16, #tpu.memory_space<vmem>>, vector<1x128x512xbf16>
    %30 = vector.shape_cast %29 : vector<1x128x512xbf16> to vector<128x512xbf16>
    %cst_15 = arith.constant dense<0.000000e+00> : vector<16x512xf32>
    %31 = tpu.matmul %28, %30, %cst_15 {dimension_numbers = #tpu.dot_dimension_numbers<[1], [0], [0], [1], [0, 0, 1, 1], [], []>} : vector<16x128xbf16>, vector<128x512xbf16>, vector<16x512xf32> -> vector<16x512xf32>
    %c0_16 = arith.constant 0 : index
    %c0_17 = arith.constant 0 : index
    %c0_18 = arith.constant 0 : index
    %32 = vector.load %arg8[%c0_16, %c0_17, %c0_18] : memref<1x1x512xf32, #tpu.memory_space<vmem>>, vector<1x1x512xf32>
    %33 = vector.shape_cast %32 : vector<1x1x512xf32> to vector<1x512xf32>
    %34 = vector.broadcast %33 : vector<1x512xf32> to vector<16x512xf32>
    %35 = arith.addf %31, %34 : vector<16x512xf32>
    %cst_19 = arith.constant 0.000000e+00 : f32
    %36 = vector.broadcast %cst_19 : f32 to vector<16x512xf32>
    %37 = arith.maximumf %35, %36 : vector<16x512xf32>
    %38 = arith.truncf %37 : vector<16x512xf32> to vector<16x512xbf16>
    %c0_20 = arith.constant 0 : index
    %c0_21 = arith.constant 0 : index
    %c0_22 = arith.constant 0 : index
    %39 = vector.load %arg9[%c0_20, %c0_21, %c0_22] : memref<1x512x128xbf16, #tpu.memory_space<vmem>>, vector<1x512x128xbf16>
    %40 = vector.shape_cast %39 : vector<1x512x128xbf16> to vector<512x128xbf16>
    %cst_23 = arith.constant dense<0.000000e+00> : vector<16x128xf32>
    %41 = tpu.matmul %38, %40, %cst_23 {dimension_numbers = #tpu.dot_dimension_numbers<[1], [0], [0], [1], [0, 0, 1, 1], [], []>} : vector<16x512xbf16>, vector<512x128xbf16>, vector<16x128xf32> -> vector<16x128xf32>
    %42 = arith.addf %3, %41 : vector<16x128xf32>
    %c0_24 = arith.constant 0 : index
    %c0_25 = arith.constant 0 : index
    %c0_26 = arith.constant 0 : index
    %43 = vector.load %arg10[%c0_24, %c0_25, %c0_26] : memref<1x1x128xf32, #tpu.memory_space<vmem>>, vector<1x1x128xf32>
    %44 = vector.shape_cast %43 : vector<1x1x128xf32> to vector<1x128xf32>
    %45 = vector.broadcast %44 : vector<1x128xf32> to vector<16x128xf32>
    %46 = arith.addf %42, %45 : vector<16x128xf32>
    %c0_27 = arith.constant 0 : index
    %c0_28 = arith.constant 0 : index
    %47 = vector.load %arg14[%c0_27, %c0_28] : memref<16x128xf32, #tpu.memory_space<vmem>>, vector<16x128xf32>
    tpu.vector_store %arg14[%c0_27, %c0_28], %46 {strides = array<i32>} : memref<16x128xf32, #tpu.memory_space<vmem>>, vector<16x128xf32>,
    %c1_i32 = arith.constant 1 : i32
    %48 = arith.cmpi eq, %arg1, %c1_i32 : i32
    %49 = arith.extui %48 : i1 to i32
    %c0_i32_29 = arith.constant 0 : i32
    %50 = arith.cmpi ne, %49, %c0_i32_29 : i32
    scf.if %50 {
      %c0_30 = arith.constant 0 : index
      %c0_31 = arith.constant 0 : index
      %51 = vector.load %arg14[%c0_30, %c0_31] : memref<16x128xf32, #tpu.memory_space<vmem>>, vector<16x128xf32>
      %cst_32 = arith.constant 0.000000e+00 : f32
      %52 = vector.broadcast %cst_32 : f32 to vector<16x128xf32>
      %53 = arith.maximumf %51, %52 : vector<16x128xf32>
      %54 = arith.truncf %53 : vector<16x128xf32> to vector<16x128xbf16>
      %c0_33 = arith.constant 0 : index
      %c0_34 = arith.constant 0 : index
      %55 = vector.load %arg11[%c0_33, %c0_34] : memref<128x128xbf16, #tpu.memory_space<vmem>>, vector<128x128xbf16>
      %cst_35 = arith.constant dense<0.000000e+00> : vector<16x128xf32>
      %56 = tpu.matmul %54, %55, %cst_35 {dimension_numbers = #tpu.dot_dimension_numbers<[1], [0], [0], [1], [0, 0, 1, 1], [], []>} : vector<16x128xbf16>, vector<128x128xbf16>, vector<16x128xf32> -> vector<16x128xf32>
      %c0_36 = arith.constant 0 : index
      %c0_37 = arith.constant 0 : index
      %57 = vector.load %arg12[%c0_36, %c0_37] : memref<1x128xf32, #tpu.memory_space<vmem>>, vector<1x128xf32>
      %58 = vector.broadcast %57 : vector<1x128xf32> to vector<16x128xf32>
      %59 = arith.addf %56, %58 : vector<16x128xf32>
      %c0_38 = arith.constant 0 : index
      %c0_39 = arith.constant 0 : index
      %60 = vector.load %arg13[%c0_38, %c0_39] : memref<16x128xf32, #tpu.memory_space<vmem>>, vector<16x128xf32>
      tpu.vector_store %arg13[%c0_38, %c0_39], %59 {strides = array<i32>} : memref<16x128xf32, #tpu.memory_space<vmem>>, vector<16x128xf32>,
    } else {
    }
    return
  }
  func.func @transform_0(%arg0: i32, %arg1: i32) -> (i32, i32) {
    %c0_i32 = arith.constant 0 : i32
    %c0_i32_0 = arith.constant 0 : i32
    return %arg0, %c0_i32 : i32, i32
  }
  func.func @transform_1(%arg0: i32, %arg1: i32) -> (i32, i32) {
    %c0_i32 = arith.constant 0 : i32
    %c0_i32_0 = arith.constant 0 : i32
    %c0_i32_1 = arith.constant 0 : i32
    return %c0_i32, %c0_i32_0 : i32, i32
  }
  func.func @transform_2(%arg0: i32, %arg1: i32) -> (i32, i32) {
    %c0_i32 = arith.constant 0 : i32
    %c0_i32_0 = arith.constant 0 : i32
    %c0_i32_1 = arith.constant 0 : i32
    return %c0_i32, %c0_i32_0 : i32, i32
  }
  func.func @transform_3(%arg0: i32, %arg1: i32) -> (i32, i32, i32) {
    %c0_i32 = arith.constant 0 : i32
    %c0_i32_0 = arith.constant 0 : i32
    %c0_i32_1 = arith.constant 0 : i32
    return %arg1, %c0_i32, %c0_i32_0 : i32, i32, i32
  }
  func.func @transform_4(%arg0: i32, %arg1: i32) -> (i32, i32, i32) {
    %c0_i32 = arith.constant 0 : i32
    %c0_i32_0 = arith.constant 0 : i32
    %c0_i32_1 = arith.constant 0 : i32
    return %arg1, %c0_i32, %c0_i32_0 : i32, i32, i32
  }
  func.func @transform_5(%arg0: i32, %arg1: i32) -> (i32, i32, i32) {
    %c0_i32 = arith.constant 0 : i32
    %c0_i32_0 = arith.constant 0 : i32
    %c0_i32_1 = arith.constant 0 : i32
    return %arg1, %c0_i32, %c0_i32_0 : i32, i32, i32
  }
  func.func @transform_6(%arg0: i32, %arg1: i32) -> (i32, i32, i32) {
    %c0_i32 = arith.constant 0 : i32
    %c0_i32_0 = arith.constant 0 : i32
    %c0_i32_1 = arith.constant 0 : i32
    return %arg1, %c0_i32, %c0_i32_0 : i32, i32, i32
  }
  func.func @transform_7(%arg0: i32, %arg1: i32) -> (i32, i32, i32) {
    %c0_i32 = arith.constant 0 : i32
    %c0_i32_0 = arith.constant 0 : i32
    %c0_i32_1 = arith.constant 0 : i32
    return %arg1, %c0_i32, %c0_i32_0 : i32, i32, i32
  }
  func.func @transform_8(%arg0: i32, %arg1: i32) -> (i32, i32, i32) {
    %c0_i32 = arith.constant 0 : i32
    %c0_i32_0 = arith.constant 0 : i32
    %c0_i32_1 = arith.constant 0 : i32
    return %arg1, %c0_i32, %c0_i32_0 : i32, i32, i32
  }
  func.func @transform_9(%arg0: i32, %arg1: i32) -> (i32, i32) {
    %c0_i32 = arith.constant 0 : i32
    %c0_i32_0 = arith.constant 0 : i32
    %c0_i32_1 = arith.constant 0 : i32
    return %c0_i32, %c0_i32_0 : i32, i32
  }
  func.func @transform_10(%arg0: i32, %arg1: i32) -> (i32, i32) {
    %c0_i32 = arith.constant 0 : i32
    %c0_i32_0 = arith.constant 0 : i32
    %c0_i32_1 = arith.constant 0 : i32
    return %c0_i32, %c0_i32_0 : i32, i32
  }
  func.func @transform_11(%arg0: i32, %arg1: i32) -> (i32, i32) {
    %c0_i32 = arith.constant 0 : i32
    %c0_i32_0 = arith.constant 0 : i32
    return %arg0, %c0_i32 : i32, i32
  }
}

</mosaic_0001>

<llo_original>
// kernel: tpu_custom_call.1
$region0: #{tpu_custom_call.1}
  #allocation0 [shape = 'u32[]', space=smem, size = 0x4, offset = 0x4, fixed_abs, tag = 'smem constant byte address 0x4 - core index']
  #allocation1 [shape = 'u32[144,128]{1,0:T(1,128)}', space=vmem, size = 0x12000, scoped, tag = 'internal scratch']
  #allocation2 [shape = 'f32[16,128]{1,0:T(8,128)}', space=vmem, size = 0x2000, scoped, tag = 'scratch operand']
  %s0 = inlined_call_operand.hbm [shape: f32[16,64], index: 0, kind: input, shape index: {}]
  %s1 = inlined_call_operand.hbm [shape: bf16[64,128], index: 1, kind: input, shape index: {}]
  %s2 = inlined_call_operand.vmem [shape: f32[1,128], index: 2, kind: input, shape index: {}]
  %s3 = inlined_call_operand.vmem [shape: f32[2,1,128], index: 3, kind: input, shape index: {}]
  %s4 = inlined_call_operand.vmem [shape: f32[2,1,128], index: 4, kind: input, shape index: {}]
  %s5 = inlined_call_operand.hbm [shape: bf16[2,128,512], index: 5, kind: input, shape index: {}]
  %s6 = inlined_call_operand.vmem [shape: f32[2,1,512], index: 6, kind: input, shape index: {}]
  %s7 = inlined_call_operand.hbm [shape: bf16[2,512,128], index: 7, kind: input, shape index: {}]
  %s8 = inlined_call_operand.vmem [shape: f32[2,1,128], index: 8, kind: input, shape index: {}]
  %s9 = inlined_call_operand.hbm [shape: bf16[128,128], index: 9, kind: input, shape index: {}]
  %s10 = inlined_call_operand.vmem [shape: f32[1,128], index: 10, kind: input, shape index: {}]
  %s11 = inlined_call_operand.hbm [shape: f32[16,128], index: 11, kind: output, shape index: {}]
  %s12 = sld [smem:[#allocation0]]
  $region105: #{tpu_custom_call.1} parent=0
    _
  %s14 = ssub.s32 1, %s12
  %s15 = scalar_select 0, %s14, %s12
  $region1: #{tpu_custom_call.1} parent=0
    #allocation3 [shape = 'u8[8192]{0}', space=vmem, size = 0x2000, scoped, tag = 'input window, operand 0, single buffered']
    #allocation4 [shape = 's32[2]{0}', space=sflag, size = 0x8, scoped, tag = 'scoped memory for tpu_custom_call.1']
    #allocation5 [shape = 's32[2]{0}', space=sflag, size = 0x8, scoped, tag = 'scoped memory for tpu_custom_call.1']
    #allocation6 [shape = 'u8[16384]{0}', space=vmem, size = 0x4000, scoped, tag = 'input window, operand 1, single buffered']
    #allocation7 [shape = 's32[1]{0}', space=sflag, size = 0x4, scoped, tag = 'scoped memory for tpu_custom_call.1']
    #allocation8 [shape = 'u8[262144]{0}', space=vmem, size = 0x40000, scoped, tag = 'input window, operand 5']
    #allocation9 [shape = 'u8[262144]{0}', space=vmem, size = 0x40000, scoped, tag = 'input window, operand 7']
    #allocation10 [shape = 'u8[32768]{0}', space=vmem, size = 0x8000, scoped, tag = 'input window, operand 9, single buffered']
    #allocation11 [shape = 'u8[8192]{0}', space=vmem, size = 0x2000, scoped, tag = 'output window, operand 0, single buffered']
    %16 = vsyncpa [#allocation4], 0
    %17 = vsyncpa [#allocation7], 0
    %18 = vsyncpa [#allocation5], 0
    loop: start=0, step=1, limit=4
    $region2: #{tpu_custom_call.1} parent=1 // loop_pre_header
      _
    $region3: #{tpu_custom_call.1} parent=1 // loop_header
      %s20 = sphi 0, %s24
      %p21 = scmp.ge.s32.totalorder %s20, 4
      %s27 = sphi 0, %s39
      %s28 = sphi 0, %s35
      %s29 = sphi 0, %s27
      %s30 = sphi 0, %s28
      %s31 = sphi 0, %s29
      %s32 = sphi 0, %s30
      %s42 = sphi 0, %s44
      %s45 = sphi 0, %s42
      %s46 = sphi 0, %s45
      %s62 = sphi 0, %s46
      %s66 = sphi 0, %s66
      %s68 = sphi 0, %s66
      %s69 = sphi 0, %s68
      %s83 = sphi 0, %s69
      %s87 = sphi 0, %s87
      %s89 = sphi 0, %s87
      %s90 = sphi 0, %s89
      %s104 = sphi 0, %s90
      %s110 = sphi 0, %s112
      %s113 = sphi 0, %s110
      %s114 = sphi 0, %s113
      %s130 = sphi 0, %s114
      %s136 = sphi 0, %s138
      %s139 = sphi 0, %s136
      %s140 = sphi 0, %s139
      %s156 = sphi 0, %s140
      %s162 = sphi 0, %s164
      %s165 = sphi 0, %s162
      %s166 = sphi 0, %s165
      %s182 = sphi 0, %s166
      %s188 = sphi 0, %s190
      %s191 = sphi 0, %s188
      %s192 = sphi 0, %s191
      %s208 = sphi 0, %s192
      %s214 = sphi 0, %s216
      %s217 = sphi 0, %s214
      %s218 = sphi 0, %s217
      %s234 = sphi 0, %s218
      %s240 = sphi 0, %s242
      %s243 = sphi 0, %s240
      %s244 = sphi 0, %s243
      %s260 = sphi 0, %s244
      %s264 = sphi 0, %s264
      %s266 = sphi 0, %s264
      %s267 = sphi 0, %s266
      %s281 = sphi 0, %s267
      %s285 = sphi 0, %s285
      %s287 = sphi 0, %s285
      %s288 = sphi 0, %s287
      %s302 = sphi 0, %s288
      %s308 = sphi 0, %s310
      %s311 = sphi 0, %s308
      %s312 = sphi 0, %s311
      %s328 = sphi 0, %s312
    $region4: #{tpu_custom_call.1} parent=1 // loop_header_branch
      %23 = sbr.rel (%p21) target = $region8
    $region5: #{tpu_custom_call.1} parent=1 // loop_body
      %s25 = ssub.s32 %s20, 1
      %s26 = ssub.s32 %s20, 2
      %s33 = sadd.s32 1, %s28
      %p34 = scmp.ge.s32.totalorder %s33, 2
      %s35 = scalar_select %p34, 0, %s33
      %s36 = sadd.s32 1, %s27
      %s37 = scalar_select %p34, %s36, %s27
      %p38 = scmp.ge.s32.totalorder %s37, 1
      %s39 = scalar_select %p38, 0, %s37
      %s40 = ssub.s32 %s27, %s39
      %p41 = scmp.eq.s32.totalorder %s40, 0
      %s43 = sadd.s32 %s42, 1
      %s44 = scalar_select %p41, %s42, %s43
      %p47 = pneg %p41
      %p48 = scmp.eq.s32.totalorder %s20, 1
      %p49 = por %p47, %p48
      %p50 = scmp.ne.s32.totalorder %s42, %s45
      %p51 = scmp.eq.s32.totalorder %s20, 0
      %p52 = por %p50, %p51
      %p53 = scmp.ne.s32.totalorder %s42, %s45
      %p54 = scmp.eq.s32.totalorder %s25, 1
      %p55 = por %p53, %p54
      %p56 = scmp.ne.s32.totalorder %s45, %s46
      %p57 = scmp.eq.s32.totalorder %s25, 0
      %p58 = por %p56, %p57
      %p59 = scmp.ne.s32.totalorder %s45, %s46
      %p60 = scmp.eq.s32.totalorder %s26, 1
      %p61 = por %p59, %p60
      %p63 = scmp.ne.s32.totalorder %s46, %s62
      %p64 = scmp.eq.s32.totalorder %s26, 0
      %p65 = por %p63, %p64
      %s67 = sadd.s32 %s66, 1
      %p70 = scmp.eq.s32.totalorder %s20, 1
      %p71 = scmp.ne.s32.totalorder %s66, %s68
      %p72 = scmp.eq.s32.totalorder %s20, 0
      %p73 = por %p71, %p72
      %p74 = scmp.ne.s32.totalorder %s66, %s68
      %p75 = scmp.eq.s32.totalorder %s25, 1
      %p76 = por %p74, %p75
      %p77 = scmp.ne.s32.totalorder %s68, %s69
      %p78 = scmp.eq.s32.totalorder %s25, 0
      %p79 = por %p77, %p78
      %p80 = scmp.ne.s32.totalorder %s68, %s69
      %p81 = scmp.eq.s32.totalorder %s26, 1
      %p82 = por %p80, %p81
      %p84 = scmp.ne.s32.totalorder %s69, %s83
      %p85 = scmp.eq.s32.totalorder %s26, 0
      %p86 = por %p84, %p85
      %s88 = sadd.s32 %s87, 1
      %p91 = scmp.eq.s32.totalorder %s20, 1
      %p92 = scmp.ne.s32.totalorder %s87, %s89
      %p93 = scmp.eq.s32.totalorder %s20, 0
      %p94 = por %p92, %p93
      %p95 = scmp.ne.s32.totalorder %s87, %s89
      %p96 = scmp.eq.s32.totalorder %s25, 1
      %p97 = por %p95, %p96
      %p98 = scmp.ne.s32.totalorder %s89, %s90
      %p99 = scmp.eq.s32.totalorder %s25, 0
      %p100 = por %p98, %p99
      %p101 = scmp.ne.s32.totalorder %s89, %s90
      %p102 = scmp.eq.s32.totalorder %s26, 1
      %p103 = por %p101, %p102
      %p105 = scmp.ne.s32.totalorder %s90, %s104
      %p106 = scmp.eq.s32.totalorder %s26, 0
      %p107 = por %p105, %p106
      %s108 = ssub.s32 %s28, %s35
      %p109 = scmp.eq.s32.totalorder %s108, 0
      %s111 = sadd.s32 %s110, 1
      %s112 = scalar_select %p109, %s110, %s111
      %p115 = pneg %p109
      %p116 = scmp.eq.s32.totalorder %s20, 1
      %p117 = por %p115, %p116
      %p118 = scmp.ne.s32.totalorder %s110, %s113
      %p119 = scmp.eq.s32.totalorder %s20, 0
      %p120 = por %p118, %p119
      %p121 = scmp.ne.s32.totalorder %s110, %s113
      %p122 = scmp.eq.s32.totalorder %s25, 1
      %p123 = por %p121, %p122
      %p124 = scmp.ne.s32.totalorder %s113, %s114
      %p125 = scmp.eq.s32.totalorder %s25, 0
      %p126 = por %p124, %p125
      %p127 = scmp.ne.s32.totalorder %s113, %s114
      %p128 = scmp.eq.s32.totalorder %s26, 1
      %p129 = por %p127, %p128
      %p131 = scmp.ne.s32.totalorder %s114, %s130
      %p132 = scmp.eq.s32.totalorder %s26, 0
      %p133 = por %p131, %p132
      %s134 = ssub.s32 %s28, %s35
      %p135 = scmp.eq.s32.totalorder %s134, 0
      %s137 = sadd.s32 %s136, 1
      %s138 = scalar_select %p135, %s136, %s137
      %p141 = pneg %p135
      %p142 = scmp.eq.s32.totalorder %s20, 1
      %p143 = por %p141, %p142
      %p144 = scmp.ne.s32.totalorder %s136, %s139
      %p145 = scmp.eq.s32.totalorder %s20, 0
      %p146 = por %p144, %p145
      %p147 = scmp.ne.s32.totalorder %s136, %s139
      %p148 = scmp.eq.s32.totalorder %s25, 1
      %p149 = por %p147, %p148
      %p150 = scmp.ne.s32.totalorder %s139, %s140
      %p151 = scmp.eq.s32.totalorder %s25, 0
      %p152 = por %p150, %p151
      %p153 = scmp.ne.s32.totalorder %s139, %s140
      %p154 = scmp.eq.s32.totalorder %s26, 1
      %p155 = por %p153, %p154
      %p157 = scmp.ne.s32.totalorder %s140, %s156
      %p158 = scmp.eq.s32.totalorder %s26, 0
      %p159 = por %p157, %p158
      %s160 = ssub.s32 %s28, %s35
      %p161 = scmp.eq.s32.totalorder %s160, 0
      %s163 = sadd.s32 %s162, 1
      %s164 = scalar_select %p161, %s162, %s163
      %p167 = pneg %p161
      %p168 = scmp.eq.s32.totalorder %s20, 1
      %p169 = por %p167, %p168
      %p170 = scmp.ne.s32.totalorder %s162, %s165
      %p171 = scmp.eq.s32.totalorder %s20, 0
      %p172 = por %p170, %p171
      %p173 = scmp.ne.s32.totalorder %s162, %s165
      %p174 = scmp.eq.s32.totalorder %s25, 1
      %p175 = por %p173, %p174
      %p176 = scmp.ne.s32.totalorder %s165, %s166
      %p177 = scmp.eq.s32.totalorder %s25, 0
      %p178 = por %p176, %p177
      %p179 = scmp.ne.s32.totalorder %s165, %s166
      %p180 = scmp.eq.s32.totalorder %s26, 1
      %p181 = por %p179, %p180
      %p183 = scmp.ne.s32.totalorder %s166, %s182
      %p184 = scmp.eq.s32.totalorder %s26, 0
      %p185 = por %p183, %p184
      %s186 = ssub.s32 %s28, %s35
      %p187 = scmp.eq.s32.totalorder %s186, 0
      %s189 = sadd.s32 %s188, 1
      %s190 = scalar_select %p187, %s188, %s189
      %p193 = pneg %p187
      %p194 = scmp.eq.s32.totalorder %s20, 1
      %p195 = por %p193, %p194
      %p196 = scmp.ne.s32.totalorder %s188, %s191
      %p197 = scmp.eq.s32.totalorder %s20, 0
      %p198 = por %p196, %p197
      %p199 = scmp.ne.s32.totalorder %s188, %s191
      %p200 = scmp.eq.s32.totalorder %s25, 1
      %p201 = por %p199, %p200
      %p202 = scmp.ne.s32.totalorder %s191, %s192
      %p203 = scmp.eq.s32.totalorder %s25, 0
      %p204 = por %p202, %p203
      %p205 = scmp.ne.s32.totalorder %s191, %s192
      %p206 = scmp.eq.s32.totalorder %s26, 1
      %p207 = por %p205, %p206
      %p209 = scmp.ne.s32.totalorder %s192, %s208
      %p210 = scmp.eq.s32.totalorder %s26, 0
      %p211 = por %p209, %p210
      %s212 = ssub.s32 %s28, %s35
      %p213 = scmp.eq.s32.totalorder %s212, 0
      %s215 = sadd.s32 %s214, 1
      %s216 = scalar_select %p213, %s214, %s215
      %p219 = pneg %p213
      %p220 = scmp.eq.s32.totalorder %s20, 1
      %p221 = por %p219, %p220
      %p222 = scmp.ne.s32.totalorder %s214, %s217
      %p223 = scmp.eq.s32.totalorder %s20, 0
      %p224 = por %p222, %p223
      %p225 = scmp.ne.s32.totalorder %s214, %s217
      %p226 = scmp.eq.s32.totalorder %s25, 1
      %p227 = por %p225, %p226
      %p228 = scmp.ne.s32.totalorder %s217, %s218
      %p229 = scmp.eq.s32.totalorder %s25, 0
      %p230 = por %p228, %p229
      %p231 = scmp.ne.s32.totalorder %s217, %s218
      %p232 = scmp.eq.s32.totalorder %s26, 1
      %p233 = por %p231, %p232
      %p235 = scmp.ne.s32.totalorder %s218, %s234
      %p236 = scmp.eq.s32.totalorder %s26, 0
      %p237 = por %p235, %p236
      %s238 = ssub.s32 %s28, %s35
      %p239 = scmp.eq.s32.totalorder %s238, 0
      %s241 = sadd.s32 %s240, 1
      %s242 = scalar_select %p239, %s240, %s241
      %p245 = pneg %p239
      %p246 = scmp.eq.s32.totalorder %s20, 1
      %p247 = por %p245, %p246
      %p248 = scmp.ne.s32.totalorder %s240, %s243
      %p249 = scmp.eq.s32.totalorder %s20, 0
      %p250 = por %p248, %p249
      %p251 = scmp.ne.s32.totalorder %s240, %s243
      %p252 = scmp.eq.s32.totalorder %s25, 1
      %p253 = por %p251, %p252
      %p254 = scmp.ne.s32.totalorder %s243, %s244
      %p255 = scmp.eq.s32.totalorder %s25, 0
      %p256 = por %p254, %p255
      %p257 = scmp.ne.s32.totalorder %s243, %s244
      %p258 = scmp.eq.s32.totalorder %s26, 1
      %p259 = por %p257, %p258
      %p261 = scmp.ne.s32.totalorder %s244, %s260
      %p262 = scmp.eq.s32.totalorder %s26, 0
      %p263 = por %p261, %p262
      %s265 = sadd.s32 %s264, 1
      %p268 = scmp.eq.s32.totalorder %s20, 1
      %p269 = scmp.ne.s32.totalorder %s264, %s266
      %p270 = scmp.eq.s32.totalorder %s20, 0
      %p271 = por %p269, %p270
      %p272 = scmp.ne.s32.totalorder %s264, %s266
      %p273 = scmp.eq.s32.totalorder %s25, 1
      %p274 = por %p272, %p273
      %p275 = scmp.ne.s32.totalorder %s266, %s267
      %p276 = scmp.eq.s32.totalorder %s25, 0
      %p277 = por %p275, %p276
      %p278 = scmp.ne.s32.totalorder %s266, %s267
      %p279 = scmp.eq.s32.totalorder %s26, 1
      %p280 = por %p278, %p279
      %p282 = scmp.ne.s32.totalorder %s267, %s281
      %p283 = scmp.eq.s32.totalorder %s26, 0
      %p284 = por %p282, %p283
      %s286 = sadd.s32 %s285, 1
      %p289 = scmp.eq.s32.totalorder %s20, 1
      %p290 = scmp.ne.s32.totalorder %s285, %s287
      %p291 = scmp.eq.s32.totalorder %s20, 0
      %p292 = por %p290, %p291
      %p293 = scmp.ne.s32.totalorder %s285, %s287
      %p294 = scmp.eq.s32.totalorder %s25, 1
      %p295 = por %p293, %p294
      %p296 = scmp.ne.s32.totalorder %s287, %s288
      %p297 = scmp.eq.s32.totalorder %s25, 0
      %p298 = por %p296, %p297
      %p299 = scmp.ne.s32.totalorder %s287, %s288
      %p300 = scmp.eq.s32.totalorder %s26, 1
      %p301 = por %p299, %p300
      %p303 = scmp.ne.s32.totalorder %s288, %s302
      %p304 = scmp.eq.s32.totalorder %s26, 0
      %p305 = por %p303, %p304
      %s306 = ssub.s32 %s27, %s39
      %p307 = scmp.eq.s32.totalorder %s306, 0
      %s309 = sadd.s32 %s308, 1
      %s310 = scalar_select %p307, %s308, %s309
      %p313 = pneg %p307
      %p314 = scmp.eq.s32.totalorder %s20, 1
      %p315 = por %p313, %p314
      %p316 = scmp.ne.s32.totalorder %s308, %s311
      %p317 = scmp.eq.s32.totalorder %s20, 0
      %p318 = por %p316, %p317
      %p319 = scmp.ne.s32.totalorder %s308, %s311
      %p320 = scmp.eq.s32.totalorder %s25, 1
      %p321 = por %p319, %p320
      %p322 = scmp.ne.s32.totalorder %s311, %s312
      %p323 = scmp.eq.s32.totalorder %s25, 0
      %p324 = por %p322, %p323
      %p325 = scmp.ne.s32.totalorder %s311, %s312
      %p326 = scmp.eq.s32.totalorder %s26, 1
      %p327 = por %p325, %p326
      %p329 = scmp.ne.s32.totalorder %s312, %s328
      %p330 = scmp.eq.s32.totalorder %s26, 0
      %p331 = por %p329, %p330
      %p332 = scmp.le.s32.totalorder 1, %s20
      %p333 = scmp.lt.s32.totalorder %s20, 3
      %p334 = pnand %p332, %p333
      %p335 = pneg %p334
      // Predicated region
      $region9: #{tpu_custom_call.1} parent=5 // pred_check
        _
      $region10: #{tpu_custom_call.1} parent=5 // pred_check_branch
        %337 = sbr.rel (%p334) target = $region12
      $region11: #{tpu_custom_call.1} parent=5 // pred_region
        %s338 = ssub.s32 %s20, 1
        // Predicated region
        $region13: #{tpu_custom_call.1} parent=11 // pred_check
          %p339 = pneg %p58
        $region14: #{tpu_custom_call.1} parent=11 // pred_check_branch
          %341 = sbr.rel (%p339) target = $region16
        $region15: #{tpu_custom_call.1} parent=11 // pred_region
          %s342 = smul.u32 2, %s29
          %s344 = ssub.s32 256, 256
          %345 = vsyncadd [#allocation4], %s344
          %s346 = smul.addr %s342, 128
          %s347 = scalar_lea.hbm %s0, %s346
          %s348 = sshll.u32 [#allocation3], 4
          %s349 = int_to_ptr.vmem [resolvable:$true] %s348
          %354 = dma.hbm_to_vmem [thread:$0]  %s347, 256, %s349, [#allocation4], 128, 128, 8
        $region16: #{tpu_custom_call.1} parent=11 // pred_fallthru
          _
        // Predicated region
        $region17: #{tpu_custom_call.1} parent=11 // pred_check
          %p355 = pneg %p79
        $region18: #{tpu_custom_call.1} parent=11 // pred_check_branch
          %357 = sbr.rel (%p355) target = $region20
        $region19: #{tpu_custom_call.1} parent=11 // pred_region
          %s359 = ssub.s32 512, 512
          %360 = vsyncadd [#allocation7], %s359
          %s361 = sshll.u32 [#allocation6], 4
          %s362 = int_to_ptr.vmem [resolvable:$true] %s361
          %367 = dma.hbm_to_vmem [thread:$0]  %s1, 512, %s362, [#allocation7], 64, 64, 4
        $region20: #{tpu_custom_call.1} parent=11 // pred_fallthru
          _
        // Predicated region
        $region21: #{tpu_custom_call.1} parent=11 // pred_check
          %p368 = pneg %p100
        $region22: #{tpu_custom_call.1} parent=11 // pred_check_branch
          %370 = sbr.rel (%p368) target = $region24
        $region23: #{tpu_custom_call.1} parent=11 // pred_region
          _
        $region24: #{tpu_custom_call.1} parent=11 // pred_fallthru
          _
        // Predicated region
        $region25: #{tpu_custom_call.1} parent=11 // pred_check
          %p371 = pneg %p277
        $region26: #{tpu_custom_call.1} parent=11 // pred_check_branch
          %373 = sbr.rel (%p371) target = $region28
        $region27: #{tpu_custom_call.1} parent=11 // pred_region
          %s375 = ssub.s32 1024, 1024
          %376 = vsyncadd [#allocation7], %s375
          %s377 = sshll.u32 [#allocation10], 4
          %s378 = int_to_ptr.vmem [resolvable:$true] %s377
          %383 = dma.hbm_to_vmem [thread:$0]  %s9, 1024, %s378, [#allocation7], 64, 64, 4
        $region28: #{tpu_custom_call.1} parent=11 // pred_fallthru
          _
        // Predicated region
        $region29: #{tpu_custom_call.1} parent=11 // pred_check
          %p384 = pneg %p298
        $region30: #{tpu_custom_call.1} parent=11 // pred_check_branch
          %386 = sbr.rel (%p384) target = $region32
        $region31: #{tpu_custom_call.1} parent=11 // pred_region
          _
        $region32: #{tpu_custom_call.1} parent=11 // pred_fallthru
          _
      $region12: #{tpu_custom_call.1} parent=5 // pred_fallthru
        _
      %p387 = scmp.lt.s32.totalorder %s20, 2
      // Predicated region
      $region33: #{tpu_custom_call.1} parent=5 // pred_check
        %p388 = pneg %p387
      $region34: #{tpu_custom_call.1} parent=5 // pred_check_branch
        %390 = sbr.rel (%p388) target = $region36
      $region35: #{tpu_custom_call.1} parent=5 // pred_region
        // Predicated region
        $region37: #{tpu_custom_call.1} parent=35 // pred_check
          %p391 = pneg %p120
        $region38: #{tpu_custom_call.1} parent=35 // pred_check_branch
          %393 = sbr.rel (%p391) target = $region40
        $region39: #{tpu_custom_call.1} parent=35 // pred_region
          %p394 = scmp.lt.s32.totalorder %s28, 1
          %s395 = scalar_select %p394, %s28, 1
          %s396 = scalar_lea.vmem %s3, %s395
        $region40: #{tpu_custom_call.1} parent=35 // pred_fallthru
          _
        // Predicated region
        $region41: #{tpu_custom_call.1} parent=35 // pred_check
          %p397 = pneg %p146
        $region42: #{tpu_custom_call.1} parent=35 // pred_check_branch
          %399 = sbr.rel (%p397) target = $region44
        $region43: #{tpu_custom_call.1} parent=35 // pred_region
          %p400 = scmp.lt.s32.totalorder %s28, 1
          %s401 = scalar_select %p400, %s28, 1
          %s402 = scalar_lea.vmem %s4, %s401
        $region44: #{tpu_custom_call.1} parent=35 // pred_fallthru
          _
        // Predicated region
        $region45: #{tpu_custom_call.1} parent=35 // pred_check
          %p403 = pneg %p172
        $region46: #{tpu_custom_call.1} parent=35 // pred_check_branch
          %405 = sbr.rel (%p403) target = $region48
        $region47: #{tpu_custom_call.1} parent=35 // pred_region
          %s406 = sand.u32 %s20, 1
          %s407 = scalar_lea.sflag [#allocation4], %s406
          %s408 = sand.u32 %s162, 1
          %s409 = smul.addr %s408, 256
          %s410 = scalar_lea.vmem [#allocation8], %s409
          %s412 = ssub.s32 4096, 4096
          %413 = vsyncadd %s407, %s412
          %s414 = smul.addr %s28, 64
          %s415 = smul.addr %s414, 64
          %s416 = scalar_lea.hbm %s5, %s415
          %s417 = sshll.u32 %s410, 4
          %s418 = int_to_ptr.vmem [resolvable:$true] %s417
          %423 = dma.hbm_to_vmem [thread:$0]  %s416, 4096, %s418, %s407, 256, 256, 16
        $region48: #{tpu_custom_call.1} parent=35 // pred_fallthru
          _
        // Predicated region
        $region49: #{tpu_custom_call.1} parent=35 // pred_check
          %p424 = pneg %p198
        $region50: #{tpu_custom_call.1} parent=35 // pred_check_branch
          %426 = sbr.rel (%p424) target = $region52
        $region51: #{tpu_custom_call.1} parent=35 // pred_region
          %p427 = scmp.lt.s32.totalorder %s28, 1
          %s428 = scalar_select %p427, %s28, 1
          %s429 = smul.addr %s428, 4
          %s430 = scalar_lea.vmem %s6, %s429
        $region52: #{tpu_custom_call.1} parent=35 // pred_fallthru
          _
        // Predicated region
        $region53: #{tpu_custom_call.1} parent=35 // pred_check
          %p431 = pneg %p224
        $region54: #{tpu_custom_call.1} parent=35 // pred_check_branch
          %433 = sbr.rel (%p431) target = $region56
        $region55: #{tpu_custom_call.1} parent=35 // pred_region
          %s434 = sand.u32 %s20, 1
          %s435 = scalar_lea.sflag [#allocation4], %s434
          %s436 = sand.u32 %s214, 1
          %s437 = smul.addr %s436, 256
          %s438 = scalar_lea.vmem [#allocation9], %s437
          %s440 = ssub.s32 4096, 4096
          %441 = vsyncadd %s435, %s440
          %s442 = smul.addr %s28, 64
          %s443 = smul.addr %s442, 64
          %s444 = scalar_lea.hbm %s7, %s443
          %s445 = sshll.u32 %s438, 4
          %s446 = int_to_ptr.vmem [resolvable:$true] %s445
          %451 = dma.hbm_to_vmem [thread:$0]  %s444, 4096, %s446, %s435, 64, 64, 4
        $region56: #{tpu_custom_call.1} parent=35 // pred_fallthru
          _
        // Predicated region
        $region57: #{tpu_custom_call.1} parent=35 // pred_check
          %p452 = pneg %p250
        $region58: #{tpu_custom_call.1} parent=35 // pred_check_branch
          %454 = sbr.rel (%p452) target = $region60
        $region59: #{tpu_custom_call.1} parent=35 // pred_region
          %p455 = scmp.lt.s32.totalorder %s28, 1
          %s456 = scalar_select %p455, %s28, 1
          %s457 = scalar_lea.vmem %s8, %s456
        $region60: #{tpu_custom_call.1} parent=35 // pred_fallthru
          _
      $region36: #{tpu_custom_call.1} parent=5 // pred_fallthru
        _
      %p458 = scmp.le.s32.totalorder 1, %s20
      %p459 = scmp.lt.s32.totalorder %s20, 3
      %p460 = pnand %p458, %p459
      %p461 = pneg %p460
      // Predicated region
      $region61: #{tpu_custom_call.1} parent=5 // pred_check
        _
      $region62: #{tpu_custom_call.1} parent=5 // pred_check_branch
        %463 = sbr.rel (%p460) target = $region64
      $region63: #{tpu_custom_call.1} parent=5 // pred_region
        %s464 = ssub.s32 %s20, 1
        // Predicated region
        $region65: #{tpu_custom_call.1} parent=63 // pred_check
          %p465 = pneg %p58
        $region66: #{tpu_custom_call.1} parent=63 // pred_check_branch
          %467 = sbr.rel (%p465) target = $region68
        $region67: #{tpu_custom_call.1} parent=63 // pred_region
          %468 = dma.done [#allocation4], 256
        $region68: #{tpu_custom_call.1} parent=63 // pred_fallthru
          _
        // Predicated region
        $region69: #{tpu_custom_call.1} parent=63 // pred_check
          %p469 = pneg %p79
        $region70: #{tpu_custom_call.1} parent=63 // pred_check_branch
          %471 = sbr.rel (%p469) target = $region72
        $region71: #{tpu_custom_call.1} parent=63 // pred_region
          %472 = dma.done [#allocation7], 512
        $region72: #{tpu_custom_call.1} parent=63 // pred_fallthru
          _
        %s473 = sand.u32 %s25, 1
        %s474 = scalar_lea.sflag [#allocation4], %s473
        %s475 = sand.u32 %s165, 1
        %s476 = smul.addr %s475, 256
        %s477 = scalar_lea.vmem [#allocation8], %s476
        // Predicated region
        $region73: #{tpu_custom_call.1} parent=63 // pred_check
          %p478 = pneg %p178
        $region74: #{tpu_custom_call.1} parent=63 // pred_check_branch
          %480 = sbr.rel (%p478) target = $region76
        $region75: #{tpu_custom_call.1} parent=63 // pred_region
          %481 = dma.done %s474, 4096
        $region76: #{tpu_custom_call.1} parent=63 // pred_fallthru
          _
        %s482 = sand.u32 %s25, 1
        %s483 = scalar_lea.sflag [#allocation4], %s482
        %s484 = sand.u32 %s217, 1
        %s485 = smul.addr %s484, 256
        %s486 = scalar_lea.vmem [#allocation9], %s485
        // Predicated region
        $region77: #{tpu_custom_call.1} parent=63 // pred_check
          %p487 = pneg %p230
        $region78: #{tpu_custom_call.1} parent=63 // pred_check_branch
          %489 = sbr.rel (%p487) target = $region80
        $region79: #{tpu_custom_call.1} parent=63 // pred_region
          %490 = dma.done %s483, 4096
        $region80: #{tpu_custom_call.1} parent=63 // pred_fallthru
          _
        // Predicated region
        $region81: #{tpu_custom_call.1} parent=63 // pred_check
          %p491 = pneg %p277
        $region82: #{tpu_custom_call.1} parent=63 // pred_check_branch
          %493 = sbr.rel (%p491) target = $region84
        $region83: #{tpu_custom_call.1} parent=63 // pred_region
          %494 = dma.done [#allocation7], 1024
        $region84: #{tpu_custom_call.1} parent=63 // pred_fallthru
          _
        %p495 = pneg %p58
        %p496 = pneg %p55
        %p497 = pneg %p79
        %p498 = pneg %p76
        %p499 = pneg %p100
        %p500 = pneg %p97
        %p501 = scmp.lt.s32.totalorder %s30, 1
        %s502 = scalar_select %p501, %s30, 1
        %s503 = scalar_lea.vmem %s3, %s502
        %p504 = pneg %p126
        %p505 = pneg %p123
        %p506 = scmp.lt.s32.totalorder %s30, 1
        %s507 = scalar_select %p506, %s30, 1
        %s508 = scalar_lea.vmem %s4, %s507
        %p509 = pneg %p152
        %p510 = pneg %p149
        %s511 = sand.u32 %s25, 1
        %s512 = scalar_lea.sflag [#allocation4], %s511
        %s513 = sand.u32 %s165, 1
        %s514 = smul.addr %s513, 256
        %s515 = scalar_lea.vmem [#allocation8], %s514
        %p516 = pneg %p178
        %p517 = pneg %p175
        %p518 = scmp.lt.s32.totalorder %s30, 1
        %s519 = scalar_select %p518, %s30, 1
        %s520 = smul.addr %s519, 4
        %s521 = scalar_lea.vmem %s6, %s520
        %p522 = pneg %p204
        %p523 = pneg %p201
        %s524 = sand.u32 %s25, 1
        %s525 = scalar_lea.sflag [#allocation4], %s524
        %s526 = sand.u32 %s217, 1
        %s527 = smul.addr %s526, 256
        %s528 = scalar_lea.vmem [#allocation9], %s527
        %p529 = pneg %p230
        %p530 = pneg %p227
        %p531 = scmp.lt.s32.totalorder %s30, 1
        %s532 = scalar_select %p531, %s30, 1
        %s533 = scalar_lea.vmem %s8, %s532
        %p534 = pneg %p256
        %p535 = pneg %p253
        %p536 = pneg %p277
        %p537 = pneg %p274
        %p538 = pneg %p298
        %p539 = pneg %p295
        %p540 = pneg %p324
        %p541 = pneg %p321
        %s542 = smul.u32 2, %s29
        %p543 = scmp.lt.s32.totalorder %s30, 1
        %s544 = scalar_select %p543, %s30, 1
        %s545 = scalar_lea.vmem %s3, %s544
        %p546 = scmp.lt.s32.totalorder %s30, 1
        %s547 = scalar_select %p546, %s30, 1
        %s548 = scalar_lea.vmem %s4, %s547
        %p549 = scmp.lt.s32.totalorder %s30, 1
        %s550 = scalar_select %p549, %s30, 1
        %s551 = smul.addr %s550, 4
        %s552 = scalar_lea.vmem %s6, %s551
        %p553 = scmp.lt.s32.totalorder %s30, 1
        %s554 = scalar_select %p553, %s30, 1
        %s555 = scalar_lea.vmem %s8, %s554
        %s556 = smul.u32 2, %s29
        %p558 = scmp.eq.s32.totalorder %s30, 0
        // Predicated region
        $region85: #{tpu_custom_call.1} parent=63 // pred_check
          %p559 = pneg %p558
        $region86: #{tpu_custom_call.1} parent=63 // pred_check_branch
          %561 = sbr.rel (%p559) target = $region88
        $region87: #{tpu_custom_call.1} parent=63 // pred_region
          %v562 = vld [vmem:[#allocation3] sm:$0xff]
          %v563 = vld [vmem:[#allocation3 + $0x8] sm:$0xff]
          %v564 = vpack.c.bf16 %v563, %v562
          %v565 = vld [vmem:[#allocation6] sm:$0xf]
          %v566 = vld [vmem:[#allocation6 + $0x4] sm:$0xf]
          %v567 = vld [vmem:[#allocation6 + $0x8] sm:$0xf]
          %v568 = vld [vmem:[#allocation6 + $0xc] sm:$0xf]
          %v569 = vld [vmem:[#allocation6 + $0x10] sm:$0xf]
          %v570 = vld [vmem:[#allocation6 + $0x14] sm:$0xf]
          %v571 = vld [vmem:[#allocation6 + $0x18] sm:$0xf]
          %v572 = vld [vmem:[#allocation6 + $0x1c] sm:$0xf]
          %v573 = vld [vmem:[%s2] sm:$0x1]
          %v575 = vlaneseq
          %v576 = vshrl.u32 %v575, 7
          %v577 = vsub.s32 0, %v576
          %v578 = vrot.slane %v573, %v577
          %v588 = vunpack.c.l.b16 %v565
          %v589 = vunpack.c.l.b16 %v566
          %v590 = vunpack.c.l.b16 %v567
          %v591 = vunpack.c.l.b16 %v568
          %v592 = vunpack.c.l.b16 %v569
          %v593 = vunpack.c.l.b16 %v570
          %v594 = vunpack.c.l.b16 %v571
          %v595 = vunpack.c.l.b16 %v572
          %v596 = vpack.c.b16 %v589, %v588
          %v597 = vpack.c.b16 %v591, %v590
          %v598 = vpack.c.b16 %v593, %v592
          %v599 = vpack.c.b16 %v595, %v594
          %vm604 = vcmask 523264
          %v606 = vsel %vm604, %v564, 0
          %608 = vmatprep.subr.bf16.mxu0 0
          %609 = vmatpush1.bf16.msra.mxu0 %v596
          %610 = vmatprep.subr.bf16.mxu0 0
          %611 = vmatpush1.bf16.msra.mxu0 %v597
          %612 = vmatprep.subr.bf16.mxu0 0
          %613 = vmatpush1.bf16.msra.mxu0 %v598
          %614 = vmatprep.subr.bf16.mxu0 0
          %615 = vmatpush1.bf16.msra.mxu0 %v599
          %616 = vmatprep.subr.bf16.mxu0 0
          %617 = vmatpush1.bf16.msra.mxu0 0
          %618 = vmatprep.subr.bf16.mxu0 0
          %619 = vmatpush1.bf16.msra.mxu0 0
          %620 = vmatprep.subr.bf16.mxu0 0
          %621 = vmatpush1.bf16.msra.mxu0 0
          %622 = vmatprep.subr.bf16.mxu0 0
          %623 = vmatpush1.bf16.msra.mxu0 0
          %624 = vmatprep.subr.bf16.mxu0 0
          %625 = vmatpush1.bf16.msra.mxu0 0
          %626 = vmatprep.subr.bf16.mxu0 0
          %627 = vmatpush1.bf16.msra.mxu0 0
          %628 = vmatprep.subr.bf16.mxu0 0
          %629 = vmatpush1.bf16.msra.mxu0 0
          %630 = vmatprep.subr.bf16.mxu0 0
          %631 = vmatpush1.bf16.msra.mxu0 0
          %632 = vmatprep.subr.bf16.mxu0 0
          %633 = vmatpush1.bf16.msra.mxu0 0
          %634 = vmatprep.subr.bf16.mxu0 0
          %635 = vmatpush1.bf16.msra.mxu0 0
          %636 = vmatprep.subr.bf16.mxu0 0
          %637 = vmatpush1.bf16.msra.mxu0 0
          %638 = vmatprep.subr.bf16.mxu0 0
          %639 = vmatpush1.bf16.msra.mxu0 0
          %640 = vmatprep.mubr.bf16.mxu0 0
          %641 = vmatmul.mubr.bf16.gmra.mrb[0].mxu0 %v606
          %v642 = vpop.f32.mrb[0].mxu0
          %v643 = vadd.f32 %v578, %v642
          %v644 = vpop.f32.mrb[0].mxu0
          %v645 = vpop.f32.mrb[0].mxu0
          %v646 = vadd.f32 %v578, %v645
          %v647 = vpop.f32.mrb[0].mxu0
          %648 = vdwg.mxu0
          %649 = vst [vmem:[#allocation2] sm:$0xff] %v643
          %650 = vst [vmem:[#allocation2 + $0x8] sm:$0xff] %v646
        $region88: #{tpu_custom_call.1} parent=63 // pred_fallthru
          _
        %v651 = vld [vmem:[#allocation2] sm:$0xff]
        %v652 = vld [vmem:[#allocation2 + $0x8] sm:$0xff]
        %653 = vadd.xlane.f32.xlu0 %v651
        %v654 = vpop.xlane.xlu0 %653
        %655 = vadd.xlane.f32.xlu0 %v652
        %v656 = vpop.xlane.xlu0 %655
        %v657 = vrcp.pop 128.0
        %v658 = vmul.f32 %v654, %v657
        %v659 = vmul.f32 %v656, %v657
        %v660 = vsub.f32 %v651, %v658
        %v661 = vsub.f32 %v652, %v659
        %v662 = vmul.f32 %v660, %v660
        %v663 = vmul.f32 %v661, %v661
        %664 = vadd.xlane.f32.xlu0 %v662
        %v665 = vpop.xlane.xlu0 %664
        %666 = vadd.xlane.f32.xlu0 %v663
        %v667 = vpop.xlane.xlu0 %666
        %v668 = vmul.f32 %v665, %v657
        %v669 = vmul.f32 %v667, %v657
        %v670 = vadd.f32 %v668, 1e-05
        %v671 = vadd.f32 %v669, 1e-05
        %v672 = vrsqrt.pop %v670
        %v673 = vrsqrt.pop %v671
        %v674 = vmul.f32 %v660, %v672
        %v675 = vmul.f32 %v661, %v673
        %v676 = vld [vmem:[%s545] sm:$0x1]
        %v678 = vlaneseq
        %v679 = vshrl.u32 %v678, 7
        %v680 = vsub.s32 0, %v679
        %v681 = vrot.slane %v676, %v680
        %v683 = vmul.f32 %v674, %v681
        %v684 = vmul.f32 %v675, %v681
        %v685 = vld [vmem:[%s548] sm:$0x1]
        %v687 = vlaneseq
        %v688 = vshrl.u32 %v687, 7
        %v689 = vsub.s32 0, %v688
        %v690 = vrot.slane %v685, %v689
        %v692 = vadd.f32 %v683, %v690
        %v693 = vadd.f32 %v684, %v690
        %v694 = vpack.c.bf16 %v693, %v692
        %v695 = vld [vmem:[%s477] sm:$0xff]
        %v696 = vld [vmem:[%s477 + $0x8] sm:$0xff]
        %v697 = vld [vmem:[%s477 + $0x10] sm:$0xff]
        %v698 = vld [vmem:[%s477 + $0x18] sm:$0xff]
        %v699 = vld [vmem:[%s477 + $0x20] sm:$0xff]
        %v700 = vld [vmem:[%s477 + $0x28] sm:$0xff]
        %v701 = vld [vmem:[%s477 + $0x30] sm:$0xff]
        %v702 = vld [vmem:[%s477 + $0x38] sm:$0xff]
        %v703 = vld [vmem:[%s477 + $0x40] sm:$0xff]
        %v704 = vld [vmem:[%s477 + $0x48] sm:$0xff]
        %v705 = vld [vmem:[%s477 + $0x50] sm:$0xff]
        %v706 = vld [vmem:[%s477 + $0x58] sm:$0xff]
        %v707 = vld [vmem:[%s477 + $0x60] sm:$0xff]
        %v708 = vld [vmem:[%s477 + $0x68] sm:$0xff]
        %v709 = vld [vmem:[%s477 + $0x70] sm:$0xff]
        %v710 = vld [vmem:[%s477 + $0x78] sm:$0xff]
        %v711 = vld [vmem:[%s477 + $0x80] sm:$0xff]
        %v712 = vld [vmem:[%s477 + $0x88] sm:$0xff]
        %v713 = vld [vmem:[%s477 + $0x90] sm:$0xff]
        %v714 = vld [vmem:[%s477 + $0x98] sm:$0xff]
        %v715 = vld [vmem:[%s477 + $0xa0] sm:$0xff]
        %v716 = vld [vmem:[%s477 + $0xa8] sm:$0xff]
        %v717 = vld [vmem:[%s477 + $0xb0] sm:$0xff]
        %v718 = vld [vmem:[%s477 + $0xb8] sm:$0xff]
        %v719 = vld [vmem:[%s477 + $0xc0] sm:$0xff]
        %v720 = vld [vmem:[%s477 + $0xc8] sm:$0xff]
        %v721 = vld [vmem:[%s477 + $0xd0] sm:$0xff]
        %v722 = vld [vmem:[%s477 + $0xd8] sm:$0xff]
        %v723 = vld [vmem:[%s477 + $0xe0] sm:$0xff]
        %v724 = vld [vmem:[%s477 + $0xe8] sm:$0xff]
        %v725 = vld [vmem:[%s477 + $0xf0] sm:$0xff]
        %v726 = vld [vmem:[%s477 + $0xf8] sm:$0xff]
        %v727 = vld [vmem:[%s552] sm:$0xf]
        %v729 = vlaneseq
        %v730 = vshrl.u32 %v729, 7
        %v731 = vsub.s32 0, %v730
        %v732 = vrot.slane %v727, %v731
        %v733 = vlaneseq
        %v734 = vshrl.u32 %v733, 7
        %v735 = vsub.s32 1, %v734
        %v736 = vrot.slane %v727, %v735
        %v737 = vlaneseq
        %v738 = vshrl.u32 %v737, 7
        %v739 = vsub.s32 2, %v738
        %v740 = vrot.slane %v727, %v739
        %v741 = vlaneseq
        %v742 = vshrl.u32 %v741, 7
        %v743 = vsub.s32 3, %v742
        %v744 = vrot.slane %v727, %v743
        %v781 = vunpack.c.l.b16 %v695
        %v782 = vunpack.c.h.b16 %v695
        %v783 = vunpack.c.l.b16 %v696
        %v784 = vunpack.c.h.b16 %v696
        %v785 = vunpack.c.l.b16 %v697
        %v786 = vunpack.c.h.b16 %v697
        %v787 = vunpack.c.l.b16 %v698
        %v788 = vunpack.c.h.b16 %v698
        %v789 = vunpack.c.l.b16 %v699
        %v790 = vunpack.c.h.b16 %v699
        %v791 = vunpack.c.l.b16 %v700
        %v792 = vunpack.c.h.b16 %v700
        %v793 = vunpack.c.l.b16 %v701
        %v794 = vunpack.c.h.b16 %v701
        %v795 = vunpack.c.l.b16 %v702
        %v796 = vunpack.c.h.b16 %v702
        %v797 = vunpack.c.l.b16 %v703
        %v798 = vunpack.c.h.b16 %v703
        %v799 = vunpack.c.l.b16 %v704
        %v800 = vunpack.c.h.b16 %v704
        %v801 = vunpack.c.l.b16 %v705
        %v802 = vunpack.c.h.b16 %v705
        %v803 = vunpack.c.l.b16 %v706
        %v804 = vunpack.c.h.b16 %v706
        %v805 = vunpack.c.l.b16 %v707
        %v806 = vunpack.c.h.b16 %v707
        %v807 = vunpack.c.l.b16 %v708
        %v808 = vunpack.c.h.b16 %v708
        %v809 = vunpack.c.l.b16 %v709
        %v810 = vunpack.c.h.b16 %v709
        %v811 = vunpack.c.l.b16 %v710
        %v812 = vunpack.c.h.b16 %v710
        %v813 = vunpack.c.l.b16 %v711
        %v814 = vunpack.c.h.b16 %v711
        %v815 = vunpack.c.l.b16 %v712
        %v816 = vunpack.c.h.b16 %v712
        %v817 = vunpack.c.l.b16 %v713
        %v818 = vunpack.c.h.b16 %v713
        %v819 = vunpack.c.l.b16 %v714
        %v820 = vunpack.c.h.b16 %v714
        %v821 = vunpack.c.l.b16 %v715
        %v822 = vunpack.c.h.b16 %v715
        %v823 = vunpack.c.l.b16 %v716
        %v824 = vunpack.c.h.b16 %v716
        %v825 = vunpack.c.l.b16 %v717
        %v826 = vunpack.c.h.b16 %v717
        %v827 = vunpack.c.l.b16 %v718
        %v828 = vunpack.c.h.b16 %v718
        %v829 = vunpack.c.l.b16 %v719
        %v830 = vunpack.c.h.b16 %v719
        %v831 = vunpack.c.l.b16 %v720
        %v832 = vunpack.c.h.b16 %v720
        %v833 = vunpack.c.l.b16 %v721
        %v834 = vunpack.c.h.b16 %v721
        %v835 = vunpack.c.l.b16 %v722
        %v836 = vunpack.c.h.b16 %v722
        %v837 = vunpack.c.l.b16 %v723
        %v838 = vunpack.c.h.b16 %v723
        %v839 = vunpack.c.l.b16 %v724
        %v840 = vunpack.c.h.b16 %v724
        %v841 = vunpack.c.l.b16 %v725
        %v842 = vunpack.c.h.b16 %v725
        %v843 = vunpack.c.l.b16 %v726
        %v844 = vunpack.c.h.b16 %v726
        %v845 = vpack.c.b16 %v785, %v781
        %v846 = vpack.c.b16 %v786, %v782
        %v847 = vpack.c.b16 %v787, %v783
        %v848 = vpack.c.b16 %v788, %v784
        %v849 = vpack.c.b16 %v793, %v789
        %v850 = vpack.c.b16 %v794, %v790
        %v851 = vpack.c.b16 %v795, %v791
        %v852 = vpack.c.b16 %v796, %v792
        %v853 = vpack.c.b16 %v801, %v797
        %v854 = vpack.c.b16 %v802, %v798
        %v855 = vpack.c.b16 %v803, %v799
        %v856 = vpack.c.b16 %v804, %v800
        %v857 = vpack.c.b16 %v809, %v805
        %v858 = vpack.c.b16 %v810, %v806
        %v859 = vpack.c.b16 %v811, %v807
        %v860 = vpack.c.b16 %v812, %v808
        %v861 = vpack.c.b16 %v817, %v813
        %v862 = vpack.c.b16 %v818, %v814
        %v863 = vpack.c.b16 %v819, %v815
        %v864 = vpack.c.b16 %v820, %v816
        %v865 = vpack.c.b16 %v825, %v821
        %v866 = vpack.c.b16 %v826, %v822
        %v867 = vpack.c.b16 %v827, %v823
        %v868 = vpack.c.b16 %v828, %v824
        %v869 = vpack.c.b16 %v833, %v829
        %v870 = vpack.c.b16 %v834, %v830
        %v871 = vpack.c.b16 %v835, %v831
        %v872 = vpack.c.b16 %v836, %v832
        %v873 = vpack.c.b16 %v841, %v837
        %v874 = vpack.c.b16 %v842, %v838
        %v875 = vpack.c.b16 %v843, %v839
        %v876 = vpack.c.b16 %v844, %v840
        %909 = vmatprep.subr.bf16.mxu0 %v846
        %910 = vmatpush1.bf16.msra.mxu0 %v845
        %911 = vmatprep.subr.bf16.mxu0 %v850
        %912 = vmatpush1.bf16.msra.mxu0 %v849
        %913 = vmatprep.subr.bf16.mxu0 %v854
        %914 = vmatpush1.bf16.msra.mxu0 %v853
        %915 = vmatprep.subr.bf16.mxu0 %v858
        %916 = vmatpush1.bf16.msra.mxu0 %v857
        %917 = vmatprep.subr.bf16.mxu0 %v862
        %918 = vmatpush1.bf16.msra.mxu0 %v861
        %919 = vmatprep.subr.bf16.mxu0 %v866
        %920 = vmatpush1.bf16.msra.mxu0 %v865
        %921 = vmatprep.subr.bf16.mxu0 %v870
        %922 = vmatpush1.bf16.msra.mxu0 %v869
        %923 = vmatprep.subr.bf16.mxu0 %v874
        %924 = vmatpush1.bf16.msra.mxu0 %v873
        %925 = vmatprep.subr.bf16.mxu0 0
        %926 = vmatpush1.bf16.msra.mxu0 0
        %927 = vmatprep.subr.bf16.mxu0 0
        %928 = vmatpush1.bf16.msra.mxu0 0
        %929 = vmatprep.subr.bf16.mxu0 0
        %930 = vmatpush1.bf16.msra.mxu0 0
        %931 = vmatprep.subr.bf16.mxu0 0
        %932 = vmatpush1.bf16.msra.mxu0 0
        %933 = vmatprep.subr.bf16.mxu0 0
        %934 = vmatpush1.bf16.msra.mxu0 0
        %935 = vmatprep.subr.bf16.mxu0 0
        %936 = vmatpush1.bf16.msra.mxu0 0
        %937 = vmatprep.subr.bf16.mxu0 0
        %938 = vmatpush1.bf16.msra.mxu0 0
        %939 = vmatprep.subr.bf16.mxu0 0
        %940 = vmatpush1.bf16.msra.mxu0 0
        %941 = vmatprep.mubr.bf16.mxu0 0
        %942 = vmatmul.mubr.bf16.gmra.mrb[0].mxu0 %v694
        %v943 = vpop.f32.mrb[0].mxu0
        %v944 = vadd.f32 %v732, %v943
        %v945 = vpop.f32.mrb[0].mxu0
        %v946 = vadd.f32 %v736, %v945
        %v947 = vpop.f32.mrb[0].mxu0
        %v948 = vadd.f32 %v732, %v947
        %v949 = vpop.f32.mrb[0].mxu0
        %v950 = vadd.f32 %v736, %v949
        %951 = vdwg.mxu0
        %952 = vmatprep.subr.bf16.mxu0 %v848
        %953 = vmatpush1.bf16.msra.mxu0 %v847
        %954 = vmatprep.subr.bf16.mxu0 %v852
        %955 = vmatpush1.bf16.msra.mxu0 %v851
        %956 = vmatprep.subr.bf16.mxu0 %v856
        %957 = vmatpush1.bf16.msra.mxu0 %v855
        %958 = vmatprep.subr.bf16.mxu0 %v860
        %959 = vmatpush1.bf16.msra.mxu0 %v859
        %960 = vmatprep.subr.bf16.mxu0 %v864
        %961 = vmatpush1.bf16.msra.mxu0 %v863
        %962 = vmatprep.subr.bf16.mxu0 %v868
        %963 = vmatpush1.bf16.msra.mxu0 %v867
        %964 = vmatprep.subr.bf16.mxu0 %v872
        %965 = vmatpush1.bf16.msra.mxu0 %v871
        %966 = vmatprep.subr.bf16.mxu0 %v876
        %967 = vmatpush1.bf16.msra.mxu0 %v875
        %968 = vmatprep.subr.bf16.mxu0 0
        %969 = vmatpush1.bf16.msra.mxu0 0
        %970 = vmatprep.subr.bf16.mxu0 0
        %971 = vmatpush1.bf16.msra.mxu0 0
        %972 = vmatprep.subr.bf16.mxu0 0
        %973 = vmatpush1.bf16.msra.mxu0 0
        %974 = vmatprep.subr.bf16.mxu0 0
        %975 = vmatpush1.bf16.msra.mxu0 0
        %976 = vmatprep.subr.bf16.mxu0 0
        %977 = vmatpush1.bf16.msra.mxu0 0
        %978 = vmatprep.subr.bf16.mxu0 0
        %979 = vmatpush1.bf16.msra.mxu0 0
        %980 = vmatprep.subr.bf16.mxu0 0
        %981 = vmatpush1.bf16.msra.mxu0 0
        %982 = vmatprep.subr.bf16.mxu0 0
        %983 = vmatpush1.bf16.msra.mxu0 0
        %984 = vmatprep.mubr.bf16.mxu0 0
        %985 = vmatmul.mubr.bf16.gmra.mrb[0].mxu0 %v694
        %v986 = vpop.f32.mrb[0].mxu0
        %v987 = vadd.f32 %v740, %v986
        %v988 = vpop.f32.mrb[0].mxu0
        %v989 = vadd.f32 %v744, %v988
        %v990 = vpop.f32.mrb[0].mxu0
        %v991 = vadd.f32 %v740, %v990
        %v992 = vpop.f32.mrb[0].mxu0
        %v993 = vadd.f32 %v744, %v992
        %994 = vdwg.mxu0
        %v995 = vmax.f32 %v944, 0.0
        %v996 = vmax.f32 %v946, 0.0
        %v997 = vmax.f32 %v987, 0.0
        %v998 = vmax.f32 %v989, 0.0
        %v999 = vmax.f32 %v948, 0.0
        %v1000 = vmax.f32 %v950, 0.0
        %v1001 = vmax.f32 %v991, 0.0
        %v1002 = vmax.f32 %v993, 0.0
        %v1003 = vpack.c.bf16 %v999, %v995
        %v1004 = vpack.c.bf16 %v1000, %v996
        %v1005 = vpack.c.bf16 %v1001, %v997
        %v1006 = vpack.c.bf16 %v1002, %v998
        %v1007 = vld [vmem:[%s486] sm:$0xf]
        %v1008 = vld [vmem:[%s486 + $0x4] sm:$0xf]
        %v1009 = vld [vmem:[%s486 + $0x8] sm:$0xf]
        %v1010 = vld [vmem:[%s486 + $0xc] sm:$0xf]
        %v1011 = vld [vmem:[%s486 + $0x10] sm:$0xf]
        %v1012 = vld [vmem:[%s486 + $0x14] sm:$0xf]
        %v1013 = vld [vmem:[%s486 + $0x18] sm:$0xf]
        %v1014 = vld [vmem:[%s486 + $0x1c] sm:$0xf]
        %v1015 = vld [vmem:[%s486 + $0x20] sm:$0xf]
        %v1016 = vld [vmem:[%s486 + $0x24] sm:$0xf]
        %v1017 = vld [vmem:[%s486 + $0x28] sm:$0xf]
        %v1018 = vld [vmem:[%s486 + $0x2c] sm:$0xf]
        %v1019 = vld [vmem:[%s486 + $0x30] sm:$0xf]
        %v1020 = vld [vmem:[%s486 + $0x34] sm:$0xf]
        %v1021 = vld [vmem:[%s486 + $0x38] sm:$0xf]
        %v1022 = vld [vmem:[%s486 + $0x3c] sm:$0xf]
        %v1023 = vld [vmem:[%s486 + $0x40] sm:$0xf]
        %v1024 = vld [vmem:[%s486 + $0x44] sm:$0xf]
        %v1025 = vld [vmem:[%s486 + $0x48] sm:$0xf]
        %v1026 = vld [vmem:[%s486 + $0x4c] sm:$0xf]
        %v1027 = vld [vmem:[%s486 + $0x50] sm:$0xf]
        %v1028 = vld [vmem:[%s486 + $0x54] sm:$0xf]
        %v1029 = vld [vmem:[%s486 + $0x58] sm:$0xf]
        %v1030 = vld [vmem:[%s486 + $0x5c] sm:$0xf]
        %v1031 = vld [vmem:[%s486 + $0x60] sm:$0xf]
        %v1032 = vld [vmem:[%s486 + $0x64] sm:$0xf]
        %v1033 = vld [vmem:[%s486 + $0x68] sm:$0xf]
        %v1034 = vld [vmem:[%s486 + $0x6c] sm:$0xf]
        %v1035 = vld [vmem:[%s486 + $0x70] sm:$0xf]
        %v1036 = vld [vmem:[%s486 + $0x74] sm:$0xf]
        %v1037 = vld [vmem:[%s486 + $0x78] sm:$0xf]
        %v1038 = vld [vmem:[%s486 + $0x7c] sm:$0xf]
        %v1039 = vld [vmem:[%s486 + $0x80] sm:$0xf]
        %v1040 = vld [vmem:[%s486 + $0x84] sm:$0xf]
        %v1041 = vld [vmem:[%s486 + $0x88] sm:$0xf]
        %v1042 = vld [vmem:[%s486 + $0x8c] sm:$0xf]
        %v1043 = vld [vmem:[%s486 + $0x90] sm:$0xf]
        %v1044 = vld [vmem:[%s486 + $0x94] sm:$0xf]
        %v1045 = vld [vmem:[%s486 + $0x98] sm:$0xf]
        %v1046 = vld [vmem:[%s486 + $0x9c] sm:$0xf]
        %v1047 = vld [vmem:[%s486 + $0xa0] sm:$0xf]
        %v1048 = vld [vmem:[%s486 + $0xa4] sm:$0xf]
        %v1049 = vld [vmem:[%s486 + $0xa8] sm:$0xf]
        %v1050 = vld [vmem:[%s486 + $0xac] sm:$0xf]
        %v1051 = vld [vmem:[%s486 + $0xb0] sm:$0xf]
        %v1052 = vld [vmem:[%s486 + $0xb4] sm:$0xf]
        %v1053 = vld [vmem:[%s486 + $0xb8] sm:$0xf]
        %v1054 = vld [vmem:[%s486 + $0xbc] sm:$0xf]
        %v1055 = vld [vmem:[%s486 + $0xc0] sm:$0xf]
        %v1056 = vld [vmem:[%s486 + $0xc4] sm:$0xf]
        %v1057 = vld [vmem:[%s486 + $0xc8] sm:$0xf]
        %v1058 = vld [vmem:[%s486 + $0xcc] sm:$0xf]
        %v1059 = vld [vmem:[%s486 + $0xd0] sm:$0xf]
        %v1060 = vld [vmem:[%s486 + $0xd4] sm:$0xf]
        %v1061 = vld [vmem:[%s486 + $0xd8] sm:$0xf]
        %v1062 = vld [vmem:[%s486 + $0xdc] sm:$0xf]
        %v1063 = vld [vmem:[%s486 + $0xe0] sm:$0xf]
        %v1064 = vld [vmem:[%s486 + $0xe4] sm:$0xf]
        %v1065 = vld [vmem:[%s486 + $0xe8] sm:$0xf]
        %v1066 = vld [vmem:[%s486 + $0xec] sm:$0xf]
        %v1067 = vld [vmem:[%s486 + $0xf0] sm:$0xf]
        %v1068 = vld [vmem:[%s486 + $0xf4] sm:$0xf]
        %v1069 = vld [vmem:[%s486 + $0xf8] sm:$0xf]
        %v1070 = vld [vmem:[%s486 + $0xfc] sm:$0xf]
        %v1135 = vunpack.c.l.b16 %v1007
        %v1136 = vunpack.c.l.b16 %v1008
        %v1137 = vunpack.c.l.b16 %v1009
        %v1138 = vunpack.c.l.b16 %v1010
        %v1139 = vunpack.c.l.b16 %v1011
        %v1140 = vunpack.c.l.b16 %v1012
        %v1141 = vunpack.c.l.b16 %v1013
        %v1142 = vunpack.c.l.b16 %v1014
        %v1143 = vunpack.c.l.b16 %v1015
        %v1144 = vunpack.c.l.b16 %v1016
        %v1145 = vunpack.c.l.b16 %v1017
        %v1146 = vunpack.c.l.b16 %v1018
        %v1147 = vunpack.c.l.b16 %v1019
        %v1148 = vunpack.c.l.b16 %v1020
        %v1149 = vunpack.c.l.b16 %v1021
        %v1150 = vunpack.c.l.b16 %v1022
        %v1151 = vunpack.c.l.b16 %v1023
        %v1152 = vunpack.c.l.b16 %v1024
        %v1153 = vunpack.c.l.b16 %v1025
        %v1154 = vunpack.c.l.b16 %v1026
        %v1155 = vunpack.c.l.b16 %v1027
        %v1156 = vunpack.c.l.b16 %v1028
        %v1157 = vunpack.c.l.b16 %v1029
        %v1158 = vunpack.c.l.b16 %v1030
        %v1159 = vunpack.c.l.b16 %v1031
        %v1160 = vunpack.c.l.b16 %v1032
        %v1161 = vunpack.c.l.b16 %v1033
        %v1162 = vunpack.c.l.b16 %v1034
        %v1163 = vunpack.c.l.b16 %v1035
        %v1164 = vunpack.c.l.b16 %v1036
        %v1165 = vunpack.c.l.b16 %v1037
        %v1166 = vunpack.c.l.b16 %v1038
        %v1167 = vunpack.c.l.b16 %v1039
        %v1168 = vunpack.c.l.b16 %v1040
        %v1169 = vunpack.c.l.b16 %v1041
        %v1170 = vunpack.c.l.b16 %v1042
        %v1171 = vunpack.c.l.b16 %v1043
        %v1172 = vunpack.c.l.b16 %v1044
        %v1173 = vunpack.c.l.b16 %v1045
        %v1174 = vunpack.c.l.b16 %v1046
        %v1175 = vunpack.c.l.b16 %v1047
        %v1176 = vunpack.c.l.b16 %v1048
        %v1177 = vunpack.c.l.b16 %v1049
        %v1178 = vunpack.c.l.b16 %v1050
        %v1179 = vunpack.c.l.b16 %v1051
        %v1180 = vunpack.c.l.b16 %v1052
        %v1181 = vunpack.c.l.b16 %v1053
        %v1182 = vunpack.c.l.b16 %v1054
        %v1183 = vunpack.c.l.b16 %v1055
        %v1184 = vunpack.c.l.b16 %v1056
        %v1185 = vunpack.c.l.b16 %v1057
        %v1186 = vunpack.c.l.b16 %v1058
        %v1187 = vunpack.c.l.b16 %v1059
        %v1188 = vunpack.c.l.b16 %v1060
        %v1189 = vunpack.c.l.b16 %v1061
        %v1190 = vunpack.c.l.b16 %v1062
        %v1191 = vunpack.c.l.b16 %v1063
        %v1192 = vunpack.c.l.b16 %v1064
        %v1193 = vunpack.c.l.b16 %v1065
        %v1194 = vunpack.c.l.b16 %v1066
        %v1195 = vunpack.c.l.b16 %v1067
        %v1196 = vunpack.c.l.b16 %v1068
        %v1197 = vunpack.c.l.b16 %v1069
        %v1198 = vunpack.c.l.b16 %v1070
        %v1199 = vpack.c.b16 %v1136, %v1135
        %v1200 = vpack.c.b16 %v1138, %v1137
        %v1201 = vpack.c.b16 %v1140, %v1139
        %v1202 = vpack.c.b16 %v1142, %v1141
        %v1203 = vpack.c.b16 %v1144, %v1143
        %v1204 = vpack.c.b16 %v1146, %v1145
        %v1205 = vpack.c.b16 %v1148, %v1147
        %v1206 = vpack.c.b16 %v1150, %v1149
        %v1207 = vpack.c.b16 %v1152, %v1151
        %v1208 = vpack.c.b16 %v1154, %v1153
        %v1209 = vpack.c.b16 %v1156, %v1155
        %v1210 = vpack.c.b16 %v1158, %v1157
        %v1211 = vpack.c.b16 %v1160, %v1159
        %v1212 = vpack.c.b16 %v1162, %v1161
        %v1213 = vpack.c.b16 %v1164, %v1163
        %v1214 = vpack.c.b16 %v1166, %v1165
        %v1215 = vpack.c.b16 %v1168, %v1167
        %v1216 = vpack.c.b16 %v1170, %v1169
        %v1217 = vpack.c.b16 %v1172, %v1171
        %v1218 = vpack.c.b16 %v1174, %v1173
        %v1219 = vpack.c.b16 %v1176, %v1175
        %v1220 = vpack.c.b16 %v1178, %v1177
        %v1221 = vpack.c.b16 %v1180, %v1179
        %v1222 = vpack.c.b16 %v1182, %v1181
        %v1223 = vpack.c.b16 %v1184, %v1183
        %v1224 = vpack.c.b16 %v1186, %v1185
        %v1225 = vpack.c.b16 %v1188, %v1187
        %v1226 = vpack.c.b16 %v1190, %v1189
        %v1227 = vpack.c.b16 %v1192, %v1191
        %v1228 = vpack.c.b16 %v1194, %v1193
        %v1229 = vpack.c.b16 %v1196, %v1195
        %v1230 = vpack.c.b16 %v1198, %v1197
        %1263 = vmatprep.subr.bf16.mxu0 0
        %1264 = vmatpush1.bf16.msra.mxu0 %v1199
        %1265 = vmatprep.subr.bf16.mxu0 0
        %1266 = vmatpush1.bf16.msra.mxu0 %v1200
        %1267 = vmatprep.subr.bf16.mxu0 0
        %1268 = vmatpush1.bf16.msra.mxu0 %v1201
        %1269 = vmatprep.subr.bf16.mxu0 0
        %1270 = vmatpush1.bf16.msra.mxu0 %v1202
        %1271 = vmatprep.subr.bf16.mxu0 0
        %1272 = vmatpush1.bf16.msra.mxu0 %v1203
        %1273 = vmatprep.subr.bf16.mxu0 0
        %1274 = vmatpush1.bf16.msra.mxu0 %v1204
        %1275 = vmatprep.subr.bf16.mxu0 0
        %1276 = vmatpush1.bf16.msra.mxu0 %v1205
        %1277 = vmatprep.subr.bf16.mxu0 0
        %1278 = vmatpush1.bf16.msra.mxu0 %v1206
        %1279 = vmatprep.subr.bf16.mxu0 0
        %1280 = vmatpush1.bf16.msra.mxu0 %v1207
        %1281 = vmatprep.subr.bf16.mxu0 0
        %1282 = vmatpush1.bf16.msra.mxu0 %v1208
        %1283 = vmatprep.subr.bf16.mxu0 0
        %1284 = vmatpush1.bf16.msra.mxu0 %v1209
        %1285 = vmatprep.subr.bf16.mxu0 0
        %1286 = vmatpush1.bf16.msra.mxu0 %v1210
        %1287 = vmatprep.subr.bf16.mxu0 0
        %1288 = vmatpush1.bf16.msra.mxu0 %v1211
        %1289 = vmatprep.subr.bf16.mxu0 0
        %1290 = vmatpush1.bf16.msra.mxu0 %v1212
        %1291 = vmatprep.subr.bf16.mxu0 0
        %1292 = vmatpush1.bf16.msra.mxu0 %v1213
        %1293 = vmatprep.subr.bf16.mxu0 0
        %1294 = vmatpush1.bf16.msra.mxu0 %v1214
        %1295 = vmatprep.mubr.bf16.mxu0 %v1004
        %1296 = vmatmul.mubr.bf16.gmra.mrb[0].mxu0 %v1003
        %v1297 = vpop.f32.mrb[0].mxu0
        %v1298 = vadd.f32 0.0, %v1297
        %v1299 = vpop.f32.mrb[0].mxu0
        %v1300 = vpop.f32.mrb[0].mxu0
        %v1301 = vadd.f32 0.0, %v1300
        %v1302 = vpop.f32.mrb[0].mxu0
        %1303 = vdwg.mxu0
        %1304 = vmatprep.subr.bf16.mxu0 0
        %1305 = vmatpush1.bf16.msra.mxu0 %v1215
        %1306 = vmatprep.subr.bf16.mxu0 0
        %1307 = vmatpush1.bf16.msra.mxu0 %v1216
        %1308 = vmatprep.subr.bf16.mxu0 0
        %1309 = vmatpush1.bf16.msra.mxu0 %v1217
        %1310 = vmatprep.subr.bf16.mxu0 0
        %1311 = vmatpush1.bf16.msra.mxu0 %v1218
        %1312 = vmatprep.subr.bf16.mxu0 0
        %1313 = vmatpush1.bf16.msra.mxu0 %v1219
        %1314 = vmatprep.subr.bf16.mxu0 0
        %1315 = vmatpush1.bf16.msra.mxu0 %v1220
        %1316 = vmatprep.subr.bf16.mxu0 0
        %1317 = vmatpush1.bf16.msra.mxu0 %v1221
        %1318 = vmatprep.subr.bf16.mxu0 0
        %1319 = vmatpush1.bf16.msra.mxu0 %v1222
        %1320 = vmatprep.subr.bf16.mxu0 0
        %1321 = vmatpush1.bf16.msra.mxu0 %v1223
        %1322 = vmatprep.subr.bf16.mxu0 0
        %1323 = vmatpush1.bf16.msra.mxu0 %v1224
        %1324 = vmatprep.subr.bf16.mxu0 0
        %1325 = vmatpush1.bf16.msra.mxu0 %v1225
        %1326 = vmatprep.subr.bf16.mxu0 0
        %1327 = vmatpush1.bf16.msra.mxu0 %v1226
        %1328 = vmatprep.subr.bf16.mxu0 0
        %1329 = vmatpush1.bf16.msra.mxu0 %v1227
        %1330 = vmatprep.subr.bf16.mxu0 0
        %1331 = vmatpush1.bf16.msra.mxu0 %v1228
        %1332 = vmatprep.subr.bf16.mxu0 0
        %1333 = vmatpush1.bf16.msra.mxu0 %v1229
        %1334 = vmatprep.subr.bf16.mxu0 0
        %1335 = vmatpush1.bf16.msra.mxu0 %v1230
        %1336 = vmatprep.mubr.bf16.mxu0 %v1006
        %1337 = vmatmul.mubr.bf16.gmra.mrb[0].mxu0 %v1005
        %v1338 = vpop.f32.mrb[0].mxu0
        %v1339 = vadd.f32 %v1298, %v1338
        %v1340 = vpop.f32.mrb[0].mxu0
        %v1341 = vpop.f32.mrb[0].mxu0
        %v1342 = vadd.f32 %v1301, %v1341
        %v1343 = vpop.f32.mrb[0].mxu0
        %1344 = vdwg.mxu0
        %v1345 = vadd.f32 %v651, %v1339
        %v1346 = vadd.f32 %v652, %v1342
        %v1347 = vld [vmem:[%s555] sm:$0x1]
        %v1349 = vlaneseq
        %v1350 = vshrl.u32 %v1349, 7
        %v1351 = vsub.s32 0, %v1350
        %v1352 = vrot.slane %v1347, %v1351
        %v1354 = vadd.f32 %v1345, %v1352
        %v1355 = vadd.f32 %v1346, %v1352
        %1356 = vst [vmem:[#allocation2] sm:$0xff] %v1354
        %1357 = vst [vmem:[#allocation2 + $0x8] sm:$0xff] %v1355
        %p1358 = scmp.eq.s32.totalorder %s30, 1
        // Predicated region
        $region89: #{tpu_custom_call.1} parent=63 // pred_check
          %p1359 = pneg %p1358
        $region90: #{tpu_custom_call.1} parent=63 // pred_check_branch
          %1361 = sbr.rel (%p1359) target = $region92
        $region91: #{tpu_custom_call.1} parent=63 // pred_region
          %v1362 = vld [vmem:[#allocation2] sm:$0xff]
          %v1363 = vld [vmem:[#allocation2 + $0x8] sm:$0xff]
          %v1364 = vmax.f32 %v1362, 0.0
          %v1365 = vmax.f32 %v1363, 0.0
          %v1366 = vpack.c.bf16 %v1365, %v1364
          %v1367 = vld [vmem:[#allocation10] sm:$0xf]
          %v1368 = vld [vmem:[#allocation10 + $0x4] sm:$0xf]
          %v1369 = vld [vmem:[#allocation10 + $0x8] sm:$0xf]
          %v1370 = vld [vmem:[#allocation10 + $0xc] sm:$0xf]
          %v1371 = vld [vmem:[#allocation10 + $0x10] sm:$0xf]
          %v1372 = vld [vmem:[#allocation10 + $0x14] sm:$0xf]
          %v1373 = vld [vmem:[#allocation10 + $0x18] sm:$0xf]
          %v1374 = vld [vmem:[#allocation10 + $0x1c] sm:$0xf]
          %v1375 = vld [vmem:[#allocation10 + $0x20] sm:$0xf]
          %v1376 = vld [vmem:[#allocation10 + $0x24] sm:$0xf]
          %v1377 = vld [vmem:[#allocation10 + $0x28] sm:$0xf]
          %v1378 = vld [vmem:[#allocation10 + $0x2c] sm:$0xf]
          %v1379 = vld [vmem:[#allocation10 + $0x30] sm:$0xf]
          %v1380 = vld [vmem:[#allocation10 + $0x34] sm:$0xf]
          %v1381 = vld [vmem:[#allocation10 + $0x38] sm:$0xf]
          %v1382 = vld [vmem:[#allocation10 + $0x3c] sm:$0xf]
          %v1383 = vld [vmem:[%s10] sm:$0x1]
          %v1385 = vlaneseq
          %v1386 = vshrl.u32 %v1385, 7
          %v1387 = vsub.s32 0, %v1386
          %v1388 = vrot.slane %v1383, %v1387
          %v1406 = vunpack.c.l.b16 %v1367
          %v1407 = vunpack.c.l.b16 %v1368
          %v1408 = vunpack.c.l.b16 %v1369
          %v1409 = vunpack.c.l.b16 %v1370
          %v1410 = vunpack.c.l.b16 %v1371
          %v1411 = vunpack.c.l.b16 %v1372
          %v1412 = vunpack.c.l.b16 %v1373
          %v1413 = vunpack.c.l.b16 %v1374
          %v1414 = vunpack.c.l.b16 %v1375
          %v1415 = vunpack.c.l.b16 %v1376
          %v1416 = vunpack.c.l.b16 %v1377
          %v1417 = vunpack.c.l.b16 %v1378
          %v1418 = vunpack.c.l.b16 %v1379
          %v1419 = vunpack.c.l.b16 %v1380
          %v1420 = vunpack.c.l.b16 %v1381
          %v1421 = vunpack.c.l.b16 %v1382
          %v1422 = vpack.c.b16 %v1407, %v1406
          %v1423 = vpack.c.b16 %v1409, %v1408
          %v1424 = vpack.c.b16 %v1411, %v1410
          %v1425 = vpack.c.b16 %v1413, %v1412
          %v1426 = vpack.c.b16 %v1415, %v1414
          %v1427 = vpack.c.b16 %v1417, %v1416
          %v1428 = vpack.c.b16 %v1419, %v1418
          %v1429 = vpack.c.b16 %v1421, %v1420
          %1438 = vmatprep.subr.bf16.mxu0 0
          %1439 = vmatpush1.bf16.msra.mxu0 %v1422
          %1440 = vmatprep.subr.bf16.mxu0 0
          %1441 = vmatpush1.bf16.msra.mxu0 %v1423
          %1442 = vmatprep.subr.bf16.mxu0 0
          %1443 = vmatpush1.bf16.msra.mxu0 %v1424
          %1444 = vmatprep.subr.bf16.mxu0 0
          %1445 = vmatpush1.bf16.msra.mxu0 %v1425
          %1446 = vmatprep.subr.bf16.mxu0 0
          %1447 = vmatpush1.bf16.msra.mxu0 %v1426
          %1448 = vmatprep.subr.bf16.mxu0 0
          %1449 = vmatpush1.bf16.msra.mxu0 %v1427
          %1450 = vmatprep.subr.bf16.mxu0 0
          %1451 = vmatpush1.bf16.msra.mxu0 %v1428
          %1452 = vmatprep.subr.bf16.mxu0 0
          %1453 = vmatpush1.bf16.msra.mxu0 %v1429
          %1454 = vmatprep.subr.bf16.mxu0 0
          %1455 = vmatpush1.bf16.msra.mxu0 0
          %1456 = vmatprep.subr.bf16.mxu0 0
          %1457 = vmatpush1.bf16.msra.mxu0 0
          %1458 = vmatprep.subr.bf16.mxu0 0
          %1459 = vmatpush1.bf16.msra.mxu0 0
          %1460 = vmatprep.subr.bf16.mxu0 0
          %1461 = vmatpush1.bf16.msra.mxu0 0
          %1462 = vmatprep.subr.bf16.mxu0 0
          %1463 = vmatpush1.bf16.msra.mxu0 0
          %1464 = vmatprep.subr.bf16.mxu0 0
          %1465 = vmatpush1.bf16.msra.mxu0 0
          %1466 = vmatprep.subr.bf16.mxu0 0
          %1467 = vmatpush1.bf16.msra.mxu0 0
          %1468 = vmatprep.subr.bf16.mxu0 0
          %1469 = vmatpush1.bf16.msra.mxu0 0
          %1470 = vmatprep.mubr.bf16.mxu0 0
          %1471 = vmatmul.mubr.bf16.gmra.mrb[0].mxu0 %v1366
          %v1472 = vpop.f32.mrb[0].mxu0
          %v1473 = vadd.f32 %v1388, %v1472
          %v1474 = vpop.f32.mrb[0].mxu0
          %v1475 = vpop.f32.mrb[0].mxu0
          %v1476 = vadd.f32 %v1388, %v1475
          %v1477 = vpop.f32.mrb[0].mxu0
          %1478 = vdwg.mxu0
          %1479 = vst [vmem:[#allocation11] sm:$0xff] %v1473
          %1480 = vst [vmem:[#allocation11 + $0x8] sm:$0xff] %v1476
        $region92: #{tpu_custom_call.1} parent=63 // pred_fallthru
          _
        // Predicated region
        $region93: #{tpu_custom_call.1} parent=63 // pred_check
          %p1481 = pneg %p321
        $region94: #{tpu_custom_call.1} parent=63 // pred_check_branch
          %1483 = sbr.rel (%p1481) target = $region96
        $region95: #{tpu_custom_call.1} parent=63 // pred_region
          %s1484 = smul.u32 2, %s29
          %s1486 = ssub.s32 256, 256
          %1487 = vsyncadd [#allocation5], %s1486
          %s1488 = smul.addr %s1484, 128
          %s1489 = scalar_lea.hbm %s11, %s1488
          %s1490 = sshll.u32 [#allocation11], 4
          %s1491 = int_to_ptr.vmem [resolvable:$true] %s1490
          %1496 = dma.vmem_to_hbm [thread:$0]  %s1491, 256, %s1489, [#allocation5], 128, 128, 8
        $region96: #{tpu_custom_call.1} parent=63 // pred_fallthru
          _
        // Predicated region
        $region97: #{tpu_custom_call.1} parent=63 // pred_check
          %p1497 = pneg %p321
        $region98: #{tpu_custom_call.1} parent=63 // pred_check_branch
          %1499 = sbr.rel (%p1497) target = $region100
        $region99: #{tpu_custom_call.1} parent=63 // pred_region
          %1500 = dma.done [#allocation5], 256
        $region100: #{tpu_custom_call.1} parent=63 // pred_fallthru
          _
      $region64: #{tpu_custom_call.1} parent=5 // pred_fallthru
        _
      %p1501 = scmp.le.s32.totalorder 2, %s20
      // Predicated region
      $region101: #{tpu_custom_call.1} parent=5 // pred_check
        %p1502 = pneg %p1501
      $region102: #{tpu_custom_call.1} parent=5 // pred_check_branch
        %1504 = sbr.rel (%p1502) target = $region104
      $region103: #{tpu_custom_call.1} parent=5 // pred_region
        %s1505 = ssub.s32 %s20, 2
      $region104: #{tpu_custom_call.1} parent=5 // pred_fallthru
        _
    $region6: #{tpu_custom_call.1} parent=1 // loop_footer
      %s24 = sadd.s32 1, %s20
    $region7: #{tpu_custom_call.1} parent=1 // loop_footer_branch
      %19 = sbr.rel target = $region3
    $region8: #{tpu_custom_call.1} parent=1 // loop_exit
      _
    %1506 = vsyncpa [#allocation4], 1
    %s1507 = scalar_lea.sflag [#allocation4], 1
    %1508 = vsyncpa %s1507, 1
    %1509 = vsyncpa [#allocation7], 1
    %1510 = vsyncpa [#allocation5], 1
    %s1511 = scalar_lea.sflag [#allocation5], 1
    %1512 = vsyncpa %s1511, 1

</llo_original>
